<compile_context>
chip_gen: v7x
topology: tpu7x:2x2x1
jax: 0.10.0
libtpu: 0.0.40
codegen_flags: <defaults>
</compile_context>

<pallas_src>
import functools

import jax
import jax.numpy as jnp
import numpy as np
from jax.experimental import pallas as pl
from jax.experimental.pallas import tpu as pltpu


def _self_attention_kernel(w_ref, b_ref, x_ref, o_ref, *, E, C, HW):
    """One grid step over a (bt, E, C*HW) slab of the batch.

    w_ref : SMEM (4*C, C) f32. Rows [Wv | Wk | Wq (pre-scaled) | Wo];
            w_ref[p*C + o, c] maps input channel c -> output channel o.
    b_ref : SMEM (4, C) f32. Rows [bv, bk, bq (pre-scaled), bo].
    x_ref : VMEM (bt, E, C*HW) f32. Channel c occupies lanes [c*HW, (c+1)*HW);
            HW is a multiple of 128, so chunks are lane-aligned.
    o_ref : VMEM (bt, E, C*HW), same layout.
    """
    x = x_ref[...]                                               # (bt, E, C*HW)
    x_chunks = [x[:, :, c * HW:(c + 1) * HW] for c in range(C)]  # lane-aligned views

    # ---- 1x1-conv projections as VPU broadcast-FMAs (C is tiny; an MXU matmul
    # with K=N=4 would be <2% utilized and require relayouts). One pass over x
    # produces V, K and Q.
    def project(p, chunks):
        outs = []
        for o in range(C):
            acc = chunks[0] * w_ref[p * C + o, 0]
            for c in range(1, C):
                acc = acc + chunks[c] * w_ref[p * C + o, c]
            outs.append(acc + b_ref[p, o])
        return outs                                              # C x (bt, E, HW)

    v_chunks = project(0, x_chunks)
    k_chunks = project(1, x_chunks)
    q_chunks = project(2, x_chunks)      # 1/sqrt(C*HW) already folded into Wq/bq

    # ---- weight_estimator: scaled dot product over (channel, spatial) between
    # ensemble members. Batched dot_general contracting the lane dim directly:
    # no ke.T, no (E, C*HW) reshape of the big tensors.
    scores = jnp.einsum("bih,bjh->bij", q_chunks[0], k_chunks[0],
                        preferred_element_type=jnp.float32)
    for c in range(1, C):
        scores = scores + jnp.einsum("bih,bjh->bij", q_chunks[c], k_chunks[c],
                                     preferred_element_type=jnp.float32)

    # Softmax over ensemble members (tiny (bt, E, E) tensor); EUP reciprocal.
    scores = scores - jnp.max(scores, axis=-1, keepdims=True)
    ew = jnp.exp(scores)
    weights = ew * pl.reciprocal(jnp.sum(ew, axis=-1, keepdims=True), approx=True)

    # ---- reweighter (ensemble mix) + output projection + residual + ReLU,
    # stored back chunk-by-chunk with lane-dense (unmasked) stores.
    tv_chunks = [jnp.einsum("bij,bjh->bih", weights, v_chunks[c],
                            preferred_element_type=jnp.float32)
                 for c in range(C)]
    for o in range(C):
        acc = tv_chunks[0] * w_ref[3 * C + o, 0]
        for c in range(1, C):
            acc = acc + tv_chunks[c] * w_ref[3 * C + o, c]
        out = acc + b_ref[3, o] + x_chunks[o]
        o_ref[:, :, o * HW:(o + 1) * HW] = jnp.maximum(out, 0.0).astype(o_ref.dtype)


def _pack_params(params, C, HW):
    """Pack 4 (C,C) weights + 4 (1,C) biases into one weight slab + one bias slab.

    The 1/sqrt(C*HW) score scale is folded into the query projection here, once.
    """
    wv, bv, wk, bk, wq, bq, wo, bo = params
    scale = jnp.float32(1.0 / np.sqrt(float(C * HW)))
    # Original convention: y = x @ W + b  (W is [c_in, c_out]); the kernel wants
    # W_p[o, c] = W[c, o], i.e. the transpose.
    w_all = jnp.concatenate([wv.T, wk.T, (wq * scale).T, wo.T],
                            axis=0).astype(jnp.float32)           # (4C, C)
    b_all = jnp.concatenate([bv, bk, bq * scale, bo],
                            axis=0).astype(jnp.float32)           # (4, C)
    return w_all, b_all


def self_attention_pallas(x_flat, w_all, b_all, *, E, C, HW):
    """x_flat: (B, E, C*HW) float32 -> same shape."""
    B = x_flat.shape[0]
    N = C * HW

    # Grid: whole batch in one step while the slab is small (the toy problem is
    # 64 KiB total -> no point in a 2-step pipeline); fall back to per-batch
    # tiles when the slab would stress VMEM.
    slab_bytes = E * N * x_flat.dtype.itemsize
    block_b = B if B * slab_bytes <= (4 << 20) else 1
    while B % block_b:
        block_b -= 1
    grid = (B // block_b,)

    kernel = functools.partial(_self_attention_kernel, E=E, C=C, HW=HW)

    grid_spec = pltpu.PrefetchScalarGridSpec(
        num_scalar_prefetch=0,
        grid=grid,
        in_specs=[
            pl.BlockSpec(memory_space=pltpu.MemorySpace.SMEM),    # packed weights
            pl.BlockSpec(memory_space=pltpu.MemorySpace.SMEM),    # packed biases
            pl.BlockSpec((block_b, E, N), lambda i: (i, 0, 0)),   # activations
        ],
        out_specs=pl.BlockSpec((block_b, E, N), lambda i: (i, 0, 0)),
    )

    return pl.pallas_call(
        kernel,
        out_shape=jax.ShapeDtypeStruct((B, E, N), x_flat.dtype),
        grid_spec=grid_spec,
        compiler_params=pltpu.CompilerParams(
            dimension_semantics=("parallel",),
            vmem_limit_bytes=32 * 1024 * 1024,   # explicit, portable across v5e/v6e/v7x
        ),
    )(w_all, b_all, x_flat)


def self_attention_module(x, params):
    """Full module forward. x: (B, E, C, H, W) -> (B, E, C, H, W)."""
    B, E, C, H, W = x.shape
    HW = H * W
    w_all, b_all = _pack_params(params, C, HW)
    # Pure reshape (no transpose): row-major (C, H, W) already flattens
    # channel-major, giving the lane-dense chunked layout the kernel expects.
    x_flat = x.reshape(B, E, C * HW)
    out_flat = self_attention_pallas(x_flat, w_all, b_all, E=E, C=C, HW=HW)
    return out_flat.reshape(B, E, C, H, W)


def self_attention_reference(x, params):
    """Pure-JAX reference with identical semantics (for verification)."""
    wv, bv, wk, bk, wq, bq, wo, bo = params
    B, E, C, H, W = x.shape
    xt = jnp.transpose(x, (0, 1, 3, 4, 2)).reshape(B, E, H * W, C)
    v = jnp.einsum("betc,cd->betd", xt, wv) + bv
    k = jnp.einsum("betc,cd->betd", xt, wk) + bk
    q = jnp.einsum("betc,cd->betd", xt, wq) + bq
    scale = 1.0 / jnp.sqrt(jnp.float32(H * W * C))
    scores = jnp.einsum("bitc,bjtc->bij", q, k) * scale
    weights = jax.nn.softmax(scores, axis=-1)
    tv = jnp.einsum("bij,bjtc->bitc", weights, v)
    out = jnp.einsum("betc,cd->betd", tv, wo) + bo
    out = jnp.maximum(out + xt, 0.0)
    return jnp.transpose(out.reshape(B, E, H, W, C), (0, 1, 4, 2, 3))


def make_params(key, C):
    keys = jax.random.split(key, 8)
    scale = 1.0 / np.sqrt(C)

    def w(k):
        return jax.random.normal(k, (C, C), jnp.float32) * scale

    def b(k):
        return jax.random.normal(k, (1, C), jnp.float32) * 0.1

    return (w(keys[0]), b(keys[1]),   # value
            w(keys[2]), b(keys[3]),   # key
            w(keys[4]), b(keys[5]),   # query
            w(keys[6]), b(keys[7]))   # output


if __name__ == "__main__":
    B, E, C, H, W = 2, 8, 4, 16, 16   # batch, ensemble members, channels, spatial
    root = jax.random.PRNGKey(0)
    k_x, k_p = jax.random.split(root)
    x = jax.random.normal(k_x, (B, E, C, H, W), jnp.float32)
    params = make_params(k_p, C)

    out = jax.block_until_ready(self_attention_module(x, params))
    ref = jax.block_until_ready(self_attention_reference(x, params))

    # Tolerance loosened vs. v1 (1e-4) because the softmax denominator now uses
    # the EUP approximate reciprocal, as requested by the performance review.
    np.testing.assert_allclose(np.asarray(out), np.asarray(ref),
                               rtol=5e-3, atol=5e-3)
    print("KERNEL_OK")
</pallas_src>

<mosaic_0001>
module attributes {stable_mosaic.version = 11 : i64} {
  func.func @_self_attention_kernel(%arg0: i32, %arg1: memref<16x4xf32, #tpu.memory_space<smem>>, %arg2: memref<4x4xf32, #tpu.memory_space<smem>>, %arg3: memref<2x8x1024xf32, #tpu.memory_space<vmem>>, %arg4: memref<2x8x1024xf32, #tpu.memory_space<vmem>>) attributes {dimension_semantics = [#tpu.dimension_semantics<parallel>], iteration_bounds = array<i64: 1>, scalar_prefetch = 0 : i64, scratch_operands = 0 : i64, tpu.core_type = #tpu.core_type<tc>, window_params = [{transform_indices = @transform_0, window_bounds = array<i64: 16, 4>}, {transform_indices = @transform_1, window_bounds = array<i64: 4, 4>}, {transform_indices = @transform_2, window_bounds = array<i64: 2, 8, 1024>}, {transform_indices = @transform_3, window_bounds = array<i64: 2, 8, 1024>}]} {
    %c0 = arith.constant 0 : index
    %c0_0 = arith.constant 0 : index
    %c0_1 = arith.constant 0 : index
    %0 = vector.load %arg3[%c0, %c0_0, %c0_1] : memref<2x8x1024xf32, #tpu.memory_space<vmem>>, vector<2x8x1024xf32>
    %1 = vector.extract_strided_slice %0 {offsets = [0, 0, 0], sizes = [2, 8, 256], strides = [1, 1, 1]} : vector<2x8x1024xf32> to vector<2x8x256xf32>
    %2 = vector.extract_strided_slice %0 {offsets = [0, 0, 256], sizes = [2, 8, 256], strides = [1, 1, 1]} : vector<2x8x1024xf32> to vector<2x8x256xf32>
    %3 = vector.extract_strided_slice %0 {offsets = [0, 0, 512], sizes = [2, 8, 256], strides = [1, 1, 1]} : vector<2x8x1024xf32> to vector<2x8x256xf32>
    %4 = vector.extract_strided_slice %0 {offsets = [0, 0, 768], sizes = [2, 8, 256], strides = [1, 1, 1]} : vector<2x8x1024xf32> to vector<2x8x256xf32>
    %c0_2 = arith.constant 0 : index
    %c0_3 = arith.constant 0 : index
    %5 = memref.load %arg1[%c0_2, %c0_3] : memref<16x4xf32, #tpu.memory_space<smem>>
    %6 = vector.broadcast %5 : f32 to vector<2x8x256xf32>
    %7 = arith.mulf %1, %6 : vector<2x8x256xf32>
    %c0_4 = arith.constant 0 : index
    %c1 = arith.constant 1 : index
    %8 = memref.load %arg1[%c0_4, %c1] : memref<16x4xf32, #tpu.memory_space<smem>>
    %9 = vector.broadcast %8 : f32 to vector<2x8x256xf32>
    %10 = arith.mulf %2, %9 : vector<2x8x256xf32>
    %11 = arith.addf %7, %10 : vector<2x8x256xf32>
    %c0_5 = arith.constant 0 : index
    %c2 = arith.constant 2 : index
    %12 = memref.load %arg1[%c0_5, %c2] : memref<16x4xf32, #tpu.memory_space<smem>>
    %13 = vector.broadcast %12 : f32 to vector<2x8x256xf32>
    %14 = arith.mulf %3, %13 : vector<2x8x256xf32>
    %15 = arith.addf %11, %14 : vector<2x8x256xf32>
    %c0_6 = arith.constant 0 : index
    %c3 = arith.constant 3 : index
    %16 = memref.load %arg1[%c0_6, %c3] : memref<16x4xf32, #tpu.memory_space<smem>>
    %17 = vector.broadcast %16 : f32 to vector<2x8x256xf32>
    %18 = arith.mulf %4, %17 : vector<2x8x256xf32>
    %19 = arith.addf %15, %18 : vector<2x8x256xf32>
    %c0_7 = arith.constant 0 : index
    %c0_8 = arith.constant 0 : index
    %20 = memref.load %arg2[%c0_7, %c0_8] : memref<4x4xf32, #tpu.memory_space<smem>>
    %21 = vector.broadcast %20 : f32 to vector<2x8x256xf32>
    %22 = arith.addf %19, %21 : vector<2x8x256xf32>
    %c1_9 = arith.constant 1 : index
    %c0_10 = arith.constant 0 : index
    %23 = memref.load %arg1[%c1_9, %c0_10] : memref<16x4xf32, #tpu.memory_space<smem>>
    %24 = vector.broadcast %23 : f32 to vector<2x8x256xf32>
    %25 = arith.mulf %1, %24 : vector<2x8x256xf32>
    %c1_11 = arith.constant 1 : index
    %c1_12 = arith.constant 1 : index
    %26 = memref.load %arg1[%c1_11, %c1_12] : memref<16x4xf32, #tpu.memory_space<smem>>
    %27 = vector.broadcast %26 : f32 to vector<2x8x256xf32>
    %28 = arith.mulf %2, %27 : vector<2x8x256xf32>
    %29 = arith.addf %25, %28 : vector<2x8x256xf32>
    %c1_13 = arith.constant 1 : index
    %c2_14 = arith.constant 2 : index
    %30 = memref.load %arg1[%c1_13, %c2_14] : memref<16x4xf32, #tpu.memory_space<smem>>
    %31 = vector.broadcast %30 : f32 to vector<2x8x256xf32>
    %32 = arith.mulf %3, %31 : vector<2x8x256xf32>
    %33 = arith.addf %29, %32 : vector<2x8x256xf32>
    %c1_15 = arith.constant 1 : index
    %c3_16 = arith.constant 3 : index
    %34 = memref.load %arg1[%c1_15, %c3_16] : memref<16x4xf32, #tpu.memory_space<smem>>
    %35 = vector.broadcast %34 : f32 to vector<2x8x256xf32>
    %36 = arith.mulf %4, %35 : vector<2x8x256xf32>
    %37 = arith.addf %33, %36 : vector<2x8x256xf32>
    %c0_17 = arith.constant 0 : index
    %c1_18 = arith.constant 1 : index
    %38 = memref.load %arg2[%c0_17, %c1_18] : memref<4x4xf32, #tpu.memory_space<smem>>
    %39 = vector.broadcast %38 : f32 to vector<2x8x256xf32>
    %40 = arith.addf %37, %39 : vector<2x8x256xf32>
    %c2_19 = arith.constant 2 : index
    %c0_20 = arith.constant 0 : index
    %41 = memref.load %arg1[%c2_19, %c0_20] : memref<16x4xf32, #tpu.memory_space<smem>>
    %42 = vector.broadcast %41 : f32 to vector<2x8x256xf32>
    %43 = arith.mulf %1, %42 : vector<2x8x256xf32>
    %c2_21 = arith.constant 2 : index
    %c1_22 = arith.constant 1 : index
    %44 = memref.load %arg1[%c2_21, %c1_22] : memref<16x4xf32, #tpu.memory_space<smem>>
    %45 = vector.broadcast %44 : f32 to vector<2x8x256xf32>
    %46 = arith.mulf %2, %45 : vector<2x8x256xf32>
    %47 = arith.addf %43, %46 : vector<2x8x256xf32>
    %c2_23 = arith.constant 2 : index
    %c2_24 = arith.constant 2 : index
    %48 = memref.load %arg1[%c2_23, %c2_24] : memref<16x4xf32, #tpu.memory_space<smem>>
    %49 = vector.broadcast %48 : f32 to vector<2x8x256xf32>
    %50 = arith.mulf %3, %49 : vector<2x8x256xf32>
    %51 = arith.addf %47, %50 : vector<2x8x256xf32>
    %c2_25 = arith.constant 2 : index
    %c3_26 = arith.constant 3 : index
    %52 = memref.load %arg1[%c2_25, %c3_26] : memref<16x4xf32, #tpu.memory_space<smem>>
    %53 = vector.broadcast %52 : f32 to vector<2x8x256xf32>
    %54 = arith.mulf %4, %53 : vector<2x8x256xf32>
    %55 = arith.addf %51, %54 : vector<2x8x256xf32>
    %c0_27 = arith.constant 0 : index
    %c2_28 = arith.constant 2 : index
    %56 = memref.load %arg2[%c0_27, %c2_28] : memref<4x4xf32, #tpu.memory_space<smem>>
    %57 = vector.broadcast %56 : f32 to vector<2x8x256xf32>
    %58 = arith.addf %55, %57 : vector<2x8x256xf32>
    %c3_29 = arith.constant 3 : index
    %c0_30 = arith.constant 0 : index
    %59 = memref.load %arg1[%c3_29, %c0_30] : memref<16x4xf32, #tpu.memory_space<smem>>
    %60 = vector.broadcast %59 : f32 to vector<2x8x256xf32>
    %61 = arith.mulf %1, %60 : vector<2x8x256xf32>
    %c3_31 = arith.constant 3 : index
    %c1_32 = arith.constant 1 : index
    %62 = memref.load %arg1[%c3_31, %c1_32] : memref<16x4xf32, #tpu.memory_space<smem>>
    %63 = vector.broadcast %62 : f32 to vector<2x8x256xf32>
    %64 = arith.mulf %2, %63 : vector<2x8x256xf32>
    %65 = arith.addf %61, %64 : vector<2x8x256xf32>
    %c3_33 = arith.constant 3 : index
    %c2_34 = arith.constant 2 : index
    %66 = memref.load %arg1[%c3_33, %c2_34] : memref<16x4xf32, #tpu.memory_space<smem>>
    %67 = vector.broadcast %66 : f32 to vector<2x8x256xf32>
    %68 = arith.mulf %3, %67 : vector<2x8x256xf32>
    %69 = arith.addf %65, %68 : vector<2x8x256xf32>
    %c3_35 = arith.constant 3 : index
    %c3_36 = arith.constant 3 : index
    %70 = memref.load %arg1[%c3_35, %c3_36] : memref<16x4xf32, #tpu.memory_space<smem>>
    %71 = vector.broadcast %70 : f32 to vector<2x8x256xf32>
    %72 = arith.mulf %4, %71 : vector<2x8x256xf32>
    %73 = arith.addf %69, %72 : vector<2x8x256xf32>
    %c0_37 = arith.constant 0 : index
    %c3_38 = arith.constant 3 : index
    %74 = memref.load %arg2[%c0_37, %c3_38] : memref<4x4xf32, #tpu.memory_space<smem>>
    %75 = vector.broadcast %74 : f32 to vector<2x8x256xf32>
    %76 = arith.addf %73, %75 : vector<2x8x256xf32>
    %c4 = arith.constant 4 : index
    %c0_39 = arith.constant 0 : index
    %77 = memref.load %arg1[%c4, %c0_39] : memref<16x4xf32, #tpu.memory_space<smem>>
    %78 = vector.broadcast %77 : f32 to vector<2x8x256xf32>
    %79 = arith.mulf %1, %78 : vector<2x8x256xf32>
    %c4_40 = arith.constant 4 : index
    %c1_41 = arith.constant 1 : index
    %80 = memref.load %arg1[%c4_40, %c1_41] : memref<16x4xf32, #tpu.memory_space<smem>>
    %81 = vector.broadcast %80 : f32 to vector<2x8x256xf32>
    %82 = arith.mulf %2, %81 : vector<2x8x256xf32>
    %83 = arith.addf %79, %82 : vector<2x8x256xf32>
    %c4_42 = arith.constant 4 : index
    %c2_43 = arith.constant 2 : index
    %84 = memref.load %arg1[%c4_42, %c2_43] : memref<16x4xf32, #tpu.memory_space<smem>>
    %85 = vector.broadcast %84 : f32 to vector<2x8x256xf32>
    %86 = arith.mulf %3, %85 : vector<2x8x256xf32>
    %87 = arith.addf %83, %86 : vector<2x8x256xf32>
    %c4_44 = arith.constant 4 : index
    %c3_45 = arith.constant 3 : index
    %88 = memref.load %arg1[%c4_44, %c3_45] : memref<16x4xf32, #tpu.memory_space<smem>>
    %89 = vector.broadcast %88 : f32 to vector<2x8x256xf32>
    %90 = arith.mulf %4, %89 : vector<2x8x256xf32>
    %91 = arith.addf %87, %90 : vector<2x8x256xf32>
    %c1_46 = arith.constant 1 : index
    %c0_47 = arith.constant 0 : index
    %92 = memref.load %arg2[%c1_46, %c0_47] : memref<4x4xf32, #tpu.memory_space<smem>>
    %93 = vector.broadcast %92 : f32 to vector<2x8x256xf32>
    %94 = arith.addf %91, %93 : vector<2x8x256xf32>
    %c5 = arith.constant 5 : index
    %c0_48 = arith.constant 0 : index
    %95 = memref.load %arg1[%c5, %c0_48] : memref<16x4xf32, #tpu.memory_space<smem>>
    %96 = vector.broadcast %95 : f32 to vector<2x8x256xf32>
    %97 = arith.mulf %1, %96 : vector<2x8x256xf32>
    %c5_49 = arith.constant 5 : index
    %c1_50 = arith.constant 1 : index
    %98 = memref.load %arg1[%c5_49, %c1_50] : memref<16x4xf32, #tpu.memory_space<smem>>
    %99 = vector.broadcast %98 : f32 to vector<2x8x256xf32>
    %100 = arith.mulf %2, %99 : vector<2x8x256xf32>
    %101 = arith.addf %97, %100 : vector<2x8x256xf32>
    %c5_51 = arith.constant 5 : index
    %c2_52 = arith.constant 2 : index
    %102 = memref.load %arg1[%c5_51, %c2_52] : memref<16x4xf32, #tpu.memory_space<smem>>
    %103 = vector.broadcast %102 : f32 to vector<2x8x256xf32>
    %104 = arith.mulf %3, %103 : vector<2x8x256xf32>
    %105 = arith.addf %101, %104 : vector<2x8x256xf32>
    %c5_53 = arith.constant 5 : index
    %c3_54 = arith.constant 3 : index
    %106 = memref.load %arg1[%c5_53, %c3_54] : memref<16x4xf32, #tpu.memory_space<smem>>
    %107 = vector.broadcast %106 : f32 to vector<2x8x256xf32>
    %108 = arith.mulf %4, %107 : vector<2x8x256xf32>
    %109 = arith.addf %105, %108 : vector<2x8x256xf32>
    %c1_55 = arith.constant 1 : index
    %c1_56 = arith.constant 1 : index
    %110 = memref.load %arg2[%c1_55, %c1_56] : memref<4x4xf32, #tpu.memory_space<smem>>
    %111 = vector.broadcast %110 : f32 to vector<2x8x256xf32>
    %112 = arith.addf %109, %111 : vector<2x8x256xf32>
    %c6 = arith.constant 6 : index
    %c0_57 = arith.constant 0 : index
    %113 = memref.load %arg1[%c6, %c0_57] : memref<16x4xf32, #tpu.memory_space<smem>>
    %114 = vector.broadcast %113 : f32 to vector<2x8x256xf32>
    %115 = arith.mulf %1, %114 : vector<2x8x256xf32>
    %c6_58 = arith.constant 6 : index
    %c1_59 = arith.constant 1 : index
    %116 = memref.load %arg1[%c6_58, %c1_59] : memref<16x4xf32, #tpu.memory_space<smem>>
    %117 = vector.broadcast %116 : f32 to vector<2x8x256xf32>
    %118 = arith.mulf %2, %117 : vector<2x8x256xf32>
    %119 = arith.addf %115, %118 : vector<2x8x256xf32>
    %c6_60 = arith.constant 6 : index
    %c2_61 = arith.constant 2 : index
    %120 = memref.load %arg1[%c6_60, %c2_61] : memref<16x4xf32, #tpu.memory_space<smem>>
    %121 = vector.broadcast %120 : f32 to vector<2x8x256xf32>
    %122 = arith.mulf %3, %121 : vector<2x8x256xf32>
    %123 = arith.addf %119, %122 : vector<2x8x256xf32>
    %c6_62 = arith.constant 6 : index
    %c3_63 = arith.constant 3 : index
    %124 = memref.load %arg1[%c6_62, %c3_63] : memref<16x4xf32, #tpu.memory_space<smem>>
    %125 = vector.broadcast %124 : f32 to vector<2x8x256xf32>
    %126 = arith.mulf %4, %125 : vector<2x8x256xf32>
    %127 = arith.addf %123, %126 : vector<2x8x256xf32>
    %c1_64 = arith.constant 1 : index
    %c2_65 = arith.constant 2 : index
    %128 = memref.load %arg2[%c1_64, %c2_65] : memref<4x4xf32, #tpu.memory_space<smem>>
    %129 = vector.broadcast %128 : f32 to vector<2x8x256xf32>
    %130 = arith.addf %127, %129 : vector<2x8x256xf32>
    %c7 = arith.constant 7 : index
    %c0_66 = arith.constant 0 : index
    %131 = memref.load %arg1[%c7, %c0_66] : memref<16x4xf32, #tpu.memory_space<smem>>
    %132 = vector.broadcast %131 : f32 to vector<2x8x256xf32>
    %133 = arith.mulf %1, %132 : vector<2x8x256xf32>
    %c7_67 = arith.constant 7 : index
    %c1_68 = arith.constant 1 : index
    %134 = memref.load %arg1[%c7_67, %c1_68] : memref<16x4xf32, #tpu.memory_space<smem>>
    %135 = vector.broadcast %134 : f32 to vector<2x8x256xf32>
    %136 = arith.mulf %2, %135 : vector<2x8x256xf32>
    %137 = arith.addf %133, %136 : vector<2x8x256xf32>
    %c7_69 = arith.constant 7 : index
    %c2_70 = arith.constant 2 : index
    %138 = memref.load %arg1[%c7_69, %c2_70] : memref<16x4xf32, #tpu.memory_space<smem>>
    %139 = vector.broadcast %138 : f32 to vector<2x8x256xf32>
    %140 = arith.mulf %3, %139 : vector<2x8x256xf32>
    %141 = arith.addf %137, %140 : vector<2x8x256xf32>
    %c7_71 = arith.constant 7 : index
    %c3_72 = arith.constant 3 : index
    %142 = memref.load %arg1[%c7_71, %c3_72] : memref<16x4xf32, #tpu.memory_space<smem>>
    %143 = vector.broadcast %142 : f32 to vector<2x8x256xf32>
    %144 = arith.mulf %4, %143 : vector<2x8x256xf32>
    %145 = arith.addf %141, %144 : vector<2x8x256xf32>
    %c1_73 = arith.constant 1 : index
    %c3_74 = arith.constant 3 : index
    %146 = memref.load %arg2[%c1_73, %c3_74] : memref<4x4xf32, #tpu.memory_space<smem>>
    %147 = vector.broadcast %146 : f32 to vector<2x8x256xf32>
    %148 = arith.addf %145, %147 : vector<2x8x256xf32>
    %c8 = arith.constant 8 : index
    %c0_75 = arith.constant 0 : index
    %149 = memref.load %arg1[%c8, %c0_75] : memref<16x4xf32, #tpu.memory_space<smem>>
    %150 = vector.broadcast %149 : f32 to vector<2x8x256xf32>
    %151 = arith.mulf %1, %150 : vector<2x8x256xf32>
    %c8_76 = arith.constant 8 : index
    %c1_77 = arith.constant 1 : index
    %152 = memref.load %arg1[%c8_76, %c1_77] : memref<16x4xf32, #tpu.memory_space<smem>>
    %153 = vector.broadcast %152 : f32 to vector<2x8x256xf32>
    %154 = arith.mulf %2, %153 : vector<2x8x256xf32>
    %155 = arith.addf %151, %154 : vector<2x8x256xf32>
    %c8_78 = arith.constant 8 : index
    %c2_79 = arith.constant 2 : index
    %156 = memref.load %arg1[%c8_78, %c2_79] : memref<16x4xf32, #tpu.memory_space<smem>>
    %157 = vector.broadcast %156 : f32 to vector<2x8x256xf32>
    %158 = arith.mulf %3, %157 : vector<2x8x256xf32>
    %159 = arith.addf %155, %158 : vector<2x8x256xf32>
    %c8_80 = arith.constant 8 : index
    %c3_81 = arith.constant 3 : index
    %160 = memref.load %arg1[%c8_80, %c3_81] : memref<16x4xf32, #tpu.memory_space<smem>>
    %161 = vector.broadcast %160 : f32 to vector<2x8x256xf32>
    %162 = arith.mulf %4, %161 : vector<2x8x256xf32>
    %163 = arith.addf %159, %162 : vector<2x8x256xf32>
    %c2_82 = arith.constant 2 : index
    %c0_83 = arith.constant 0 : index
    %164 = memref.load %arg2[%c2_82, %c0_83] : memref<4x4xf32, #tpu.memory_space<smem>>
    %165 = vector.broadcast %164 : f32 to vector<2x8x256xf32>
    %166 = arith.addf %163, %165 : vector<2x8x256xf32>
    %c9 = arith.constant 9 : index
    %c0_84 = arith.constant 0 : index
    %167 = memref.load %arg1[%c9, %c0_84] : memref<16x4xf32, #tpu.memory_space<smem>>
    %168 = vector.broadcast %167 : f32 to vector<2x8x256xf32>
    %169 = arith.mulf %1, %168 : vector<2x8x256xf32>
    %c9_85 = arith.constant 9 : index
    %c1_86 = arith.constant 1 : index
    %170 = memref.load %arg1[%c9_85, %c1_86] : memref<16x4xf32, #tpu.memory_space<smem>>
    %171 = vector.broadcast %170 : f32 to vector<2x8x256xf32>
    %172 = arith.mulf %2, %171 : vector<2x8x256xf32>
    %173 = arith.addf %169, %172 : vector<2x8x256xf32>
    %c9_87 = arith.constant 9 : index
    %c2_88 = arith.constant 2 : index
    %174 = memref.load %arg1[%c9_87, %c2_88] : memref<16x4xf32, #tpu.memory_space<smem>>
    %175 = vector.broadcast %174 : f32 to vector<2x8x256xf32>
    %176 = arith.mulf %3, %175 : vector<2x8x256xf32>
    %177 = arith.addf %173, %176 : vector<2x8x256xf32>
    %c9_89 = arith.constant 9 : index
    %c3_90 = arith.constant 3 : index
    %178 = memref.load %arg1[%c9_89, %c3_90] : memref<16x4xf32, #tpu.memory_space<smem>>
    %179 = vector.broadcast %178 : f32 to vector<2x8x256xf32>
    %180 = arith.mulf %4, %179 : vector<2x8x256xf32>
    %181 = arith.addf %177, %180 : vector<2x8x256xf32>
    %c2_91 = arith.constant 2 : index
    %c1_92 = arith.constant 1 : index
    %182 = memref.load %arg2[%c2_91, %c1_92] : memref<4x4xf32, #tpu.memory_space<smem>>
    %183 = vector.broadcast %182 : f32 to vector<2x8x256xf32>
    %184 = arith.addf %181, %183 : vector<2x8x256xf32>
    %c10 = arith.constant 10 : index
    %c0_93 = arith.constant 0 : index
    %185 = memref.load %arg1[%c10, %c0_93] : memref<16x4xf32, #tpu.memory_space<smem>>
    %186 = vector.broadcast %185 : f32 to vector<2x8x256xf32>
    %187 = arith.mulf %1, %186 : vector<2x8x256xf32>
    %c10_94 = arith.constant 10 : index
    %c1_95 = arith.constant 1 : index
    %188 = memref.load %arg1[%c10_94, %c1_95] : memref<16x4xf32, #tpu.memory_space<smem>>
    %189 = vector.broadcast %188 : f32 to vector<2x8x256xf32>
    %190 = arith.mulf %2, %189 : vector<2x8x256xf32>
    %191 = arith.addf %187, %190 : vector<2x8x256xf32>
    %c10_96 = arith.constant 10 : index
    %c2_97 = arith.constant 2 : index
    %192 = memref.load %arg1[%c10_96, %c2_97] : memref<16x4xf32, #tpu.memory_space<smem>>
    %193 = vector.broadcast %192 : f32 to vector<2x8x256xf32>
    %194 = arith.mulf %3, %193 : vector<2x8x256xf32>
    %195 = arith.addf %191, %194 : vector<2x8x256xf32>
    %c10_98 = arith.constant 10 : index
    %c3_99 = arith.constant 3 : index
    %196 = memref.load %arg1[%c10_98, %c3_99] : memref<16x4xf32, #tpu.memory_space<smem>>
    %197 = vector.broadcast %196 : f32 to vector<2x8x256xf32>
    %198 = arith.mulf %4, %197 : vector<2x8x256xf32>
    %199 = arith.addf %195, %198 : vector<2x8x256xf32>
    %c2_100 = arith.constant 2 : index
    %c2_101 = arith.constant 2 : index
    %200 = memref.load %arg2[%c2_100, %c2_101] : memref<4x4xf32, #tpu.memory_space<smem>>
    %201 = vector.broadcast %200 : f32 to vector<2x8x256xf32>
    %202 = arith.addf %199, %201 : vector<2x8x256xf32>
    %c11 = arith.constant 11 : index
    %c0_102 = arith.constant 0 : index
    %203 = memref.load %arg1[%c11, %c0_102] : memref<16x4xf32, #tpu.memory_space<smem>>
    %204 = vector.broadcast %203 : f32 to vector<2x8x256xf32>
    %205 = arith.mulf %1, %204 : vector<2x8x256xf32>
    %c11_103 = arith.constant 11 : index
    %c1_104 = arith.constant 1 : index
    %206 = memref.load %arg1[%c11_103, %c1_104] : memref<16x4xf32, #tpu.memory_space<smem>>
    %207 = vector.broadcast %206 : f32 to vector<2x8x256xf32>
    %208 = arith.mulf %2, %207 : vector<2x8x256xf32>
    %209 = arith.addf %205, %208 : vector<2x8x256xf32>
    %c11_105 = arith.constant 11 : index
    %c2_106 = arith.constant 2 : index
    %210 = memref.load %arg1[%c11_105, %c2_106] : memref<16x4xf32, #tpu.memory_space<smem>>
    %211 = vector.broadcast %210 : f32 to vector<2x8x256xf32>
    %212 = arith.mulf %3, %211 : vector<2x8x256xf32>
    %213 = arith.addf %209, %212 : vector<2x8x256xf32>
    %c11_107 = arith.constant 11 : index
    %c3_108 = arith.constant 3 : index
    %214 = memref.load %arg1[%c11_107, %c3_108] : memref<16x4xf32, #tpu.memory_space<smem>>
    %215 = vector.broadcast %214 : f32 to vector<2x8x256xf32>
    %216 = arith.mulf %4, %215 : vector<2x8x256xf32>
    %217 = arith.addf %213, %216 : vector<2x8x256xf32>
    %c2_109 = arith.constant 2 : index
    %c3_110 = arith.constant 3 : index
    %218 = memref.load %arg2[%c2_109, %c3_110] : memref<4x4xf32, #tpu.memory_space<smem>>
    %219 = vector.broadcast %218 : f32 to vector<2x8x256xf32>
    %220 = arith.addf %217, %219 : vector<2x8x256xf32>
    "tpu.trace_start"() <{level = 10 : i32, message = "bih,bjh->bij"}> : () -> ()
    %cst = arith.constant dense<0.000000e+00> : vector<2x8x8xf32>
    %221 = tpu.matmul %166, %94, %cst {dimension_numbers = #tpu.dot_dimension_numbers<[2], [2], [1], [1], [0, 0, 0, 1, 1, 1], [0], [0]>} : vector<2x8x256xf32>, vector<2x8x256xf32>, vector<2x8x8xf32> -> vector<2x8x8xf32>
    %cst_111 = arith.constant dense<0.000000e+00> : vector<2x8x8xf32>
    %222 = tpu.matmul %184, %112, %cst_111 {dimension_numbers = #tpu.dot_dimension_numbers<[2], [2], [1], [1], [0, 0, 0, 1, 1, 1], [0], [0]>} : vector<2x8x256xf32>, vector<2x8x256xf32>, vector<2x8x8xf32> -> vector<2x8x8xf32>
    "tpu.trace_stop"() : () -> ()
    %223 = arith.addf %221, %222 : vector<2x8x8xf32>
    "tpu.trace_start"() <{level = 10 : i32, message = "bih,bjh->bij"}> : () -> ()
    %cst_112 = arith.constant dense<0.000000e+00> : vector<2x8x8xf32>
    %224 = tpu.matmul %202, %130, %cst_112 {dimension_numbers = #tpu.dot_dimension_numbers<[2], [2], [1], [1], [0, 0, 0, 1, 1, 1], [0], [0]>} : vector<2x8x256xf32>, vector<2x8x256xf32>, vector<2x8x8xf32> -> vector<2x8x8xf32>
    "tpu.trace_stop"() : () -> ()
    %225 = arith.addf %223, %224 : vector<2x8x8xf32>
    "tpu.trace_start"() <{level = 10 : i32, message = "bih,bjh->bij"}> : () -> ()
    %cst_113 = arith.constant dense<0.000000e+00> : vector<2x8x8xf32>
    %226 = tpu.matmul %220, %148, %cst_113 {dimension_numbers = #tpu.dot_dimension_numbers<[2], [2], [1], [1], [0, 0, 0, 1, 1, 1], [0], [0]>} : vector<2x8x256xf32>, vector<2x8x256xf32>, vector<2x8x8xf32> -> vector<2x8x8xf32>
    "tpu.trace_stop"() : () -> ()
    %227 = arith.addf %225, %226 : vector<2x8x8xf32>
    %cst_114 = arith.constant dense<0xFF800000> : vector<2x8xf32>
    %228 = vector.multi_reduction <maximumf>, %227, %cst_114 [2] : vector<2x8x8xf32> to vector<2x8xf32>
    %229 = vector.shape_cast %228 : vector<2x8xf32> to vector<2x8x1xf32>
    %230 = vector.broadcast %229 : vector<2x8x1xf32> to vector<2x8x8xf32>
    %231 = arith.subf %227, %230 : vector<2x8x8xf32>
    %232 = math.exp %231 : vector<2x8x8xf32>
    %cst_115 = arith.constant dense<0.000000e+00> : vector<2x8xf32>
    %233 = vector.multi_reduction <add>, %232, %cst_115 [2] : vector<2x8x8xf32> to vector<2x8xf32>
    %234 = vector.shape_cast %233 : vector<2x8xf32> to vector<2x8x1xf32>
    %235 = tpu.reciprocal %234 {approx = true} : vector<2x8x1xf32> -> vector<2x8x1xf32>
    %236 = vector.broadcast %235 : vector<2x8x1xf32> to vector<2x8x8xf32>
    %237 = arith.mulf %232, %236 : vector<2x8x8xf32>
    "tpu.trace_start"() <{level = 10 : i32, message = "bij,bjh->bih"}> : () -> ()
    %cst_116 = arith.constant dense<0.000000e+00> : vector<2x8x256xf32>
    %238 = tpu.matmul %237, %22, %cst_116 {dimension_numbers = #tpu.dot_dimension_numbers<[2], [1], [1], [2], [0, 0, 0, 1, 1, 2], [0], [0]>} : vector<2x8x8xf32>, vector<2x8x256xf32>, vector<2x8x256xf32> -> vector<2x8x256xf32>
    %cst_117 = arith.constant dense<0.000000e+00> : vector<2x8x256xf32>
    %239 = tpu.matmul %237, %40, %cst_117 {dimension_numbers = #tpu.dot_dimension_numbers<[2], [1], [1], [2], [0, 0, 0, 1, 1, 2], [0], [0]>} : vector<2x8x8xf32>, vector<2x8x256xf32>, vector<2x8x256xf32> -> vector<2x8x256xf32>
    %cst_118 = arith.constant dense<0.000000e+00> : vector<2x8x256xf32>
    %240 = tpu.matmul %237, %58, %cst_118 {dimension_numbers = #tpu.dot_dimension_numbers<[2], [1], [1], [2], [0, 0, 0, 1, 1, 2], [0], [0]>} : vector<2x8x8xf32>, vector<2x8x256xf32>, vector<2x8x256xf32> -> vector<2x8x256xf32>
    %cst_119 = arith.constant dense<0.000000e+00> : vector<2x8x256xf32>
    %241 = tpu.matmul %237, %76, %cst_119 {dimension_numbers = #tpu.dot_dimension_numbers<[2], [1], [1], [2], [0, 0, 0, 1, 1, 2], [0], [0]>} : vector<2x8x8xf32>, vector<2x8x256xf32>, vector<2x8x256xf32> -> vector<2x8x256xf32>
    "tpu.trace_stop"() : () -> ()
    %c12 = arith.constant 12 : index
    %c0_120 = arith.constant 0 : index
    %242 = memref.load %arg1[%c12, %c0_120] : memref<16x4xf32, #tpu.memory_space<smem>>
    %243 = vector.broadcast %242 : f32 to vector<2x8x256xf32>
    %244 = arith.mulf %238, %243 : vector<2x8x256xf32>
    %c12_121 = arith.constant 12 : index
    %c1_122 = arith.constant 1 : index
    %245 = memref.load %arg1[%c12_121, %c1_122] : memref<16x4xf32, #tpu.memory_space<smem>>
    %246 = vector.broadcast %245 : f32 to vector<2x8x256xf32>
    %247 = arith.mulf %239, %246 : vector<2x8x256xf32>
    %248 = arith.addf %244, %247 : vector<2x8x256xf32>
    %c12_123 = arith.constant 12 : index
    %c2_124 = arith.constant 2 : index
    %249 = memref.load %arg1[%c12_123, %c2_124] : memref<16x4xf32, #tpu.memory_space<smem>>
    %250 = vector.broadcast %249 : f32 to vector<2x8x256xf32>
    %251 = arith.mulf %240, %250 : vector<2x8x256xf32>
    %252 = arith.addf %248, %251 : vector<2x8x256xf32>
    %c12_125 = arith.constant 12 : index
    %c3_126 = arith.constant 3 : index
    %253 = memref.load %arg1[%c12_125, %c3_126] : memref<16x4xf32, #tpu.memory_space<smem>>
    %254 = vector.broadcast %253 : f32 to vector<2x8x256xf32>
    %255 = arith.mulf %241, %254 : vector<2x8x256xf32>
    %256 = arith.addf %252, %255 : vector<2x8x256xf32>
    %c3_127 = arith.constant 3 : index
    %c0_128 = arith.constant 0 : index
    %257 = memref.load %arg2[%c3_127, %c0_128] : memref<4x4xf32, #tpu.memory_space<smem>>
    %258 = vector.broadcast %257 : f32 to vector<2x8x256xf32>
    %259 = arith.addf %256, %258 : vector<2x8x256xf32>
    %260 = arith.addf %259, %1 : vector<2x8x256xf32>
    %cst_129 = arith.constant 0.000000e+00 : f32
    %261 = vector.broadcast %cst_129 : f32 to vector<2x8x256xf32>
    %262 = arith.maximumf %260, %261 : vector<2x8x256xf32>
    %c0_130 = arith.constant 0 : index
    %c0_131 = arith.constant 0 : index
    %c0_132 = arith.constant 0 : index
    %263 = vector.load %arg4[%c0_130, %c0_131, %c0_132] : memref<2x8x1024xf32, #tpu.memory_space<vmem>>, vector<2x8x256xf32>
    tpu.vector_store %arg4[%c0_130, %c0_131, %c0_132], %262 {strides = array<i32>} : memref<2x8x1024xf32, #tpu.memory_space<vmem>>, vector<2x8x256xf32>,
    %c13 = arith.constant 13 : index
    %c0_133 = arith.constant 0 : index
    %264 = memref.load %arg1[%c13, %c0_133] : memref<16x4xf32, #tpu.memory_space<smem>>
    %265 = vector.broadcast %264 : f32 to vector<2x8x256xf32>
    %266 = arith.mulf %238, %265 : vector<2x8x256xf32>
    %c13_134 = arith.constant 13 : index
    %c1_135 = arith.constant 1 : index
    %267 = memref.load %arg1[%c13_134, %c1_135] : memref<16x4xf32, #tpu.memory_space<smem>>
    %268 = vector.broadcast %267 : f32 to vector<2x8x256xf32>
    %269 = arith.mulf %239, %268 : vector<2x8x256xf32>
    %270 = arith.addf %266, %269 : vector<2x8x256xf32>
    %c13_136 = arith.constant 13 : index
    %c2_137 = arith.constant 2 : index
    %271 = memref.load %arg1[%c13_136, %c2_137] : memref<16x4xf32, #tpu.memory_space<smem>>
    %272 = vector.broadcast %271 : f32 to vector<2x8x256xf32>
    %273 = arith.mulf %240, %272 : vector<2x8x256xf32>
    %274 = arith.addf %270, %273 : vector<2x8x256xf32>
    %c13_138 = arith.constant 13 : index
    %c3_139 = arith.constant 3 : index
    %275 = memref.load %arg1[%c13_138, %c3_139] : memref<16x4xf32, #tpu.memory_space<smem>>
    %276 = vector.broadcast %275 : f32 to vector<2x8x256xf32>
    %277 = arith.mulf %241, %276 : vector<2x8x256xf32>
    %278 = arith.addf %274, %277 : vector<2x8x256xf32>
    %c3_140 = arith.constant 3 : index
    %c1_141 = arith.constant 1 : index
    %279 = memref.load %arg2[%c3_140, %c1_141] : memref<4x4xf32, #tpu.memory_space<smem>>
    %280 = vector.broadcast %279 : f32 to vector<2x8x256xf32>
    %281 = arith.addf %278, %280 : vector<2x8x256xf32>
    %282 = arith.addf %281, %2 : vector<2x8x256xf32>
    %cst_142 = arith.constant 0.000000e+00 : f32
    %283 = vector.broadcast %cst_142 : f32 to vector<2x8x256xf32>
    %284 = arith.maximumf %282, %283 : vector<2x8x256xf32>
    %c0_143 = arith.constant 0 : index
    %c0_144 = arith.constant 0 : index
    %c256 = arith.constant 256 : index
    %285 = vector.load %arg4[%c0_143, %c0_144, %c256] : memref<2x8x1024xf32, #tpu.memory_space<vmem>>, vector<2x8x256xf32>
    tpu.vector_store %arg4[%c0_143, %c0_144, %c256], %284 {strides = array<i32>} : memref<2x8x1024xf32, #tpu.memory_space<vmem>>, vector<2x8x256xf32>,
    %c14 = arith.constant 14 : index
    %c0_145 = arith.constant 0 : index
    %286 = memref.load %arg1[%c14, %c0_145] : memref<16x4xf32, #tpu.memory_space<smem>>
    %287 = vector.broadcast %286 : f32 to vector<2x8x256xf32>
    %288 = arith.mulf %238, %287 : vector<2x8x256xf32>
    %c14_146 = arith.constant 14 : index
    %c1_147 = arith.constant 1 : index
    %289 = memref.load %arg1[%c14_146, %c1_147] : memref<16x4xf32, #tpu.memory_space<smem>>
    %290 = vector.broadcast %289 : f32 to vector<2x8x256xf32>
    %291 = arith.mulf %239, %290 : vector<2x8x256xf32>
    %292 = arith.addf %288, %291 : vector<2x8x256xf32>
    %c14_148 = arith.constant 14 : index
    %c2_149 = arith.constant 2 : index
    %293 = memref.load %arg1[%c14_148, %c2_149] : memref<16x4xf32, #tpu.memory_space<smem>>
    %294 = vector.broadcast %293 : f32 to vector<2x8x256xf32>
    %295 = arith.mulf %240, %294 : vector<2x8x256xf32>
    %296 = arith.addf %292, %295 : vector<2x8x256xf32>
    %c14_150 = arith.constant 14 : index
    %c3_151 = arith.constant 3 : index
    %297 = memref.load %arg1[%c14_150, %c3_151] : memref<16x4xf32, #tpu.memory_space<smem>>
    %298 = vector.broadcast %297 : f32 to vector<2x8x256xf32>
    %299 = arith.mulf %241, %298 : vector<2x8x256xf32>
    %300 = arith.addf %296, %299 : vector<2x8x256xf32>
    %c3_152 = arith.constant 3 : index
    %c2_153 = arith.constant 2 : index
    %301 = memref.load %arg2[%c3_152, %c2_153] : memref<4x4xf32, #tpu.memory_space<smem>>
    %302 = vector.broadcast %301 : f32 to vector<2x8x256xf32>
    %303 = arith.addf %300, %302 : vector<2x8x256xf32>
    %304 = arith.addf %303, %3 : vector<2x8x256xf32>
    %cst_154 = arith.constant 0.000000e+00 : f32
    %305 = vector.broadcast %cst_154 : f32 to vector<2x8x256xf32>
    %306 = arith.maximumf %304, %305 : vector<2x8x256xf32>
    %c0_155 = arith.constant 0 : index
    %c0_156 = arith.constant 0 : index
    %c512 = arith.constant 512 : index
    %307 = vector.load %arg4[%c0_155, %c0_156, %c512] : memref<2x8x1024xf32, #tpu.memory_space<vmem>>, vector<2x8x256xf32>
    tpu.vector_store %arg4[%c0_155, %c0_156, %c512], %306 {strides = array<i32>} : memref<2x8x1024xf32, #tpu.memory_space<vmem>>, vector<2x8x256xf32>,
    %c15 = arith.constant 15 : index
    %c0_157 = arith.constant 0 : index
    %308 = memref.load %arg1[%c15, %c0_157] : memref<16x4xf32, #tpu.memory_space<smem>>
    %309 = vector.broadcast %308 : f32 to vector<2x8x256xf32>
    %310 = arith.mulf %238, %309 : vector<2x8x256xf32>
    %c15_158 = arith.constant 15 : index
    %c1_159 = arith.constant 1 : index
    %311 = memref.load %arg1[%c15_158, %c1_159] : memref<16x4xf32, #tpu.memory_space<smem>>
    %312 = vector.broadcast %311 : f32 to vector<2x8x256xf32>
    %313 = arith.mulf %239, %312 : vector<2x8x256xf32>
    %314 = arith.addf %310, %313 : vector<2x8x256xf32>
    %c15_160 = arith.constant 15 : index
    %c2_161 = arith.constant 2 : index
    %315 = memref.load %arg1[%c15_160, %c2_161] : memref<16x4xf32, #tpu.memory_space<smem>>
    %316 = vector.broadcast %315 : f32 to vector<2x8x256xf32>
    %317 = arith.mulf %240, %316 : vector<2x8x256xf32>
    %318 = arith.addf %314, %317 : vector<2x8x256xf32>
    %c15_162 = arith.constant 15 : index
    %c3_163 = arith.constant 3 : index
    %319 = memref.load %arg1[%c15_162, %c3_163] : memref<16x4xf32, #tpu.memory_space<smem>>
    %320 = vector.broadcast %319 : f32 to vector<2x8x256xf32>
    %321 = arith.mulf %241, %320 : vector<2x8x256xf32>
    %322 = arith.addf %318, %321 : vector<2x8x256xf32>
    %c3_164 = arith.constant 3 : index
    %c3_165 = arith.constant 3 : index
    %323 = memref.load %arg2[%c3_164, %c3_165] : memref<4x4xf32, #tpu.memory_space<smem>>
    %324 = vector.broadcast %323 : f32 to vector<2x8x256xf32>
    %325 = arith.addf %322, %324 : vector<2x8x256xf32>
    %326 = arith.addf %325, %4 : vector<2x8x256xf32>
    %cst_166 = arith.constant 0.000000e+00 : f32
    %327 = vector.broadcast %cst_166 : f32 to vector<2x8x256xf32>
    %328 = arith.maximumf %326, %327 : vector<2x8x256xf32>
    %c0_167 = arith.constant 0 : index
    %c0_168 = arith.constant 0 : index
    %c768 = arith.constant 768 : index
    %329 = vector.load %arg4[%c0_167, %c0_168, %c768] : memref<2x8x1024xf32, #tpu.memory_space<vmem>>, vector<2x8x256xf32>
    tpu.vector_store %arg4[%c0_167, %c0_168, %c768], %328 {strides = array<i32>} : memref<2x8x1024xf32, #tpu.memory_space<vmem>>, vector<2x8x256xf32>,
    return
  }
  func.func @transform_0(%arg0: i32) -> (i32, i32) {
    %c0_i32 = arith.constant 0 : i32
    %c0_i32_0 = arith.constant 0 : i32
    %c0_i32_1 = arith.constant 0 : i32
    return %c0_i32, %c0_i32_0 : i32, i32
  }
  func.func @transform_1(%arg0: i32) -> (i32, i32) {
    %c0_i32 = arith.constant 0 : i32
    %c0_i32_0 = arith.constant 0 : i32
    %c0_i32_1 = arith.constant 0 : i32
    return %c0_i32, %c0_i32_0 : i32, i32
  }
  func.func @transform_2(%arg0: i32) -> (i32, i32, i32) {
    %c0_i32 = arith.constant 0 : i32
    %c0_i32_0 = arith.constant 0 : i32
    %c0_i32_1 = arith.constant 0 : i32
    return %arg0, %c0_i32, %c0_i32_0 : i32, i32, i32
  }
  func.func @transform_3(%arg0: i32) -> (i32, i32, i32) {
    %c0_i32 = arith.constant 0 : i32
    %c0_i32_0 = arith.constant 0 : i32
    %c0_i32_1 = arith.constant 0 : i32
    return %arg0, %c0_i32, %c0_i32_0 : i32, i32, i32
  }
}

</mosaic_0001>

<llo_original>
// kernel: tpu_custom_call.1
$region0: #{tpu_custom_call.1}
  #allocation0 [shape = 'u32[]', space=smem, size = 0x4, offset = 0x4, fixed_abs, tag = 'smem constant byte address 0x4 - core index']
  #allocation1 [shape = 'u32[144,128]{1,0:T(1,128)}', space=vmem, size = 0x12000, scoped, tag = 'internal scratch']
  %s0 = inlined_call_operand.vmem [shape: f32[16,4], index: 0, kind: input, shape index: {}]
  %s1 = inlined_call_operand.vmem [shape: f32[4,4], index: 1, kind: input, shape index: {}]
  %s2 = inlined_call_operand.hbm [shape: f32[2,8,1024], index: 2, kind: input, shape index: {}]
  %s3 = inlined_call_operand.hbm [shape: f32[2,8,1024], index: 3, kind: output, shape index: {}]
  %s4 = sld [smem:[#allocation0]]
  $region34: #{tpu_custom_call.1} parent=0
    _
  %s6 = ssub.s32 1, %s4
  %s7 = scalar_select 0, %s6, %s4
  $region1: #{tpu_custom_call.1} parent=0
    #allocation2 [shape = 'u8[8192]{0}', space=smem, size = 0x2000, scoped, tag = 'input window, operand 0, single buffered']
    #allocation3 [shape = 's32[1]{0}', space=sflag, size = 0x4, scoped, tag = 'scoped memory for tpu_custom_call.1']
    #allocation4 [shape = 's32[1]{0}', space=sflag, size = 0x4, scoped, tag = 'scoped memory for tpu_custom_call.1']
    #allocation5 [shape = 's32[1]{0}', space=sflag, size = 0x4, scoped, tag = 'scoped memory for tpu_custom_call.1']
    #allocation6 [shape = 'u8[2048]{0}', space=smem, size = 0x800, scoped, tag = 'input window, operand 1, single buffered']
    #allocation7 [shape = 's32[1]{0}', space=sflag, size = 0x4, scoped, tag = 'scoped memory for tpu_custom_call.1']
    #allocation8 [shape = 'u8[65536]{0}', space=vmem, size = 0x10000, scoped, tag = 'input window, operand 2, single buffered']
    #allocation9 [shape = 'u8[65536]{0}', space=vmem, size = 0x10000, scoped, tag = 'output window, operand 0, single buffered']
    %8 = vsyncpa [#allocation5], 0
    %9 = vsyncpa [#allocation7], 0
    %10 = vsyncpa [#allocation3], 0
    %11 = vsyncpa [#allocation4], 0
    // Predicated region
    $region2: #{tpu_custom_call.1} parent=1 // pred_check
      _
    $region3: #{tpu_custom_call.1} parent=1 // pred_check_branch
      %13 = sbr.rel (0) target = $region5
    $region4: #{tpu_custom_call.1} parent=1 // pred_region
      %s15 = ssub.s32 256, 256
      %16 = vsyncadd [#allocation5], %s15
      %s17 = sshll.u32 %s0, 4
      %s18 = int_to_ptr.vmem [resolvable:$true] %s17
      %23 = dma.vmem_to_smem %s18, 256, [#allocation2], [#allocation5], 128, 128, 8
    $region5: #{tpu_custom_call.1} parent=1 // pred_fallthru
      _
    // Predicated region
    $region6: #{tpu_custom_call.1} parent=1 // pred_check
      _
    $region7: #{tpu_custom_call.1} parent=1 // pred_check_branch
      %25 = sbr.rel (0) target = $region9
    $region8: #{tpu_custom_call.1} parent=1 // pred_region
      %s27 = ssub.s32 64, 64
      %28 = vsyncadd [#allocation7], %s27
      %s30 = sshll.u32 %s1, 4
      %s31 = int_to_ptr.vmem [resolvable:$true] %s30
      %33 = dma.vmem_to_smem %s31, 64, [#allocation6], [#allocation7]
    $region9: #{tpu_custom_call.1} parent=1 // pred_fallthru
      _
    // Predicated region
    $region10: #{tpu_custom_call.1} parent=1 // pred_check
      _
    $region11: #{tpu_custom_call.1} parent=1 // pred_check_branch
      %35 = sbr.rel (0) target = $region13
    $region12: #{tpu_custom_call.1} parent=1 // pred_region
      %s37 = ssub.s32 2048, 2048
      %38 = vsyncadd [#allocation3], %s37
      %s39 = sshll.u32 [#allocation8], 4
      %s40 = int_to_ptr.vmem [resolvable:$true] %s39
      %45 = dma.hbm_to_vmem [thread:$0]  %s2, 2048, %s40, [#allocation3], 1024, 1024, 64
    $region13: #{tpu_custom_call.1} parent=1 // pred_fallthru
      _
    // Predicated region
    $region14: #{tpu_custom_call.1} parent=1 // pred_check
      _
    $region15: #{tpu_custom_call.1} parent=1 // pred_check_branch
      %47 = sbr.rel (0) target = $region17
    $region16: #{tpu_custom_call.1} parent=1 // pred_region
      %48 = dma.done [#allocation5], 256
    $region17: #{tpu_custom_call.1} parent=1 // pred_fallthru
      _
    // Predicated region
    $region18: #{tpu_custom_call.1} parent=1 // pred_check
      _
    $region19: #{tpu_custom_call.1} parent=1 // pred_check_branch
      %50 = sbr.rel (0) target = $region21
    $region20: #{tpu_custom_call.1} parent=1 // pred_region
      %51 = dma.done [#allocation7], 64
    $region21: #{tpu_custom_call.1} parent=1 // pred_fallthru
      _
    // Predicated region
    $region22: #{tpu_custom_call.1} parent=1 // pred_check
      _
    $region23: #{tpu_custom_call.1} parent=1 // pred_check_branch
      %53 = sbr.rel (0) target = $region25
    $region24: #{tpu_custom_call.1} parent=1 // pred_region
      %54 = dma.done [#allocation3], 2048
    $region25: #{tpu_custom_call.1} parent=1 // pred_fallthru
      _
    %55 = sfence
    %v56 = vld [vmem:[#allocation8] sm:$0xff]
    %v57 = vld [vmem:[#allocation8 + $0x8] sm:$0xff]
    %v58 = vld [vmem:[#allocation8 + $0x10] sm:$0xff]
    %v59 = vld [vmem:[#allocation8 + $0x18] sm:$0xff]
    %v60 = vld [vmem:[#allocation8 + $0x20] sm:$0xff]
    %v61 = vld [vmem:[#allocation8 + $0x28] sm:$0xff]
    %v62 = vld [vmem:[#allocation8 + $0x30] sm:$0xff]
    %v63 = vld [vmem:[#allocation8 + $0x38] sm:$0xff]
    %v64 = vld [vmem:[#allocation8 + $0x40] sm:$0xff]
    %v65 = vld [vmem:[#allocation8 + $0x48] sm:$0xff]
    %v66 = vld [vmem:[#allocation8 + $0x50] sm:$0xff]
    %v67 = vld [vmem:[#allocation8 + $0x58] sm:$0xff]
    %v68 = vld [vmem:[#allocation8 + $0x60] sm:$0xff]
    %v69 = vld [vmem:[#allocation8 + $0x68] sm:$0xff]
    %v70 = vld [vmem:[#allocation8 + $0x70] sm:$0xff]
    %v71 = vld [vmem:[#allocation8 + $0x78] sm:$0xff]
    %s72 = sld [smem:[#allocation2]]
    %v73 = vstv %s72
    %v74 = vmul.f32 %v56, %v73
    %v75 = vmul.f32 %v57, %v73
    %v76 = vmul.f32 %v64, %v73
    %v77 = vmul.f32 %v65, %v73
    %s78 = sld [smem:[#allocation2 + $0x1]]
    %v79 = vstv %s78
    %v80 = vmul.f32 %v58, %v79
    %v81 = vmul.f32 %v59, %v79
    %v82 = vmul.f32 %v66, %v79
    %v83 = vmul.f32 %v67, %v79
    %v84 = vadd.f32 %v74, %v80
    %v85 = vadd.f32 %v75, %v81
    %v86 = vadd.f32 %v76, %v82
    %v87 = vadd.f32 %v77, %v83
    %s88 = sld [smem:[#allocation2 + $0x2]]
    %v89 = vstv %s88
    %v90 = vmul.f32 %v60, %v89
    %v91 = vmul.f32 %v61, %v89
    %v92 = vmul.f32 %v68, %v89
    %v93 = vmul.f32 %v69, %v89
    %v94 = vadd.f32 %v84, %v90
    %v95 = vadd.f32 %v85, %v91
    %v96 = vadd.f32 %v86, %v92
    %v97 = vadd.f32 %v87, %v93
    %s98 = sld [smem:[#allocation2 + $0x3]]
    %v99 = vstv %s98
    %v100 = vmul.f32 %v62, %v99
    %v101 = vmul.f32 %v63, %v99
    %v102 = vmul.f32 %v70, %v99
    %v103 = vmul.f32 %v71, %v99
    %v104 = vadd.f32 %v94, %v100
    %v105 = vadd.f32 %v95, %v101
    %v106 = vadd.f32 %v96, %v102
    %v107 = vadd.f32 %v97, %v103
    %s108 = sld [smem:[#allocation6]]
    %v109 = vstv %s108
    %v110 = vadd.f32 %v104, %v109
    %v111 = vadd.f32 %v105, %v109
    %v112 = vadd.f32 %v106, %v109
    %v113 = vadd.f32 %v107, %v109
    %s114 = sld [smem:[#allocation2 + $0x80]]
    %v115 = vstv %s114
    %v116 = vmul.f32 %v56, %v115
    %v117 = vmul.f32 %v57, %v115
    %v118 = vmul.f32 %v64, %v115
    %v119 = vmul.f32 %v65, %v115
    %s120 = sld [smem:[#allocation2 + $0x81]]
    %v121 = vstv %s120
    %v122 = vmul.f32 %v58, %v121
    %v123 = vmul.f32 %v59, %v121
    %v124 = vmul.f32 %v66, %v121
    %v125 = vmul.f32 %v67, %v121
    %v126 = vadd.f32 %v116, %v122
    %v127 = vadd.f32 %v117, %v123
    %v128 = vadd.f32 %v118, %v124
    %v129 = vadd.f32 %v119, %v125
    %s130 = sld [smem:[#allocation2 + $0x82]]
    %v131 = vstv %s130
    %v132 = vmul.f32 %v60, %v131
    %v133 = vmul.f32 %v61, %v131
    %v134 = vmul.f32 %v68, %v131
    %v135 = vmul.f32 %v69, %v131
    %v136 = vadd.f32 %v126, %v132
    %v137 = vadd.f32 %v127, %v133
    %v138 = vadd.f32 %v128, %v134
    %v139 = vadd.f32 %v129, %v135
    %s140 = sld [smem:[#allocation2 + $0x83]]
    %v141 = vstv %s140
    %v142 = vmul.f32 %v62, %v141
    %v143 = vmul.f32 %v63, %v141
    %v144 = vmul.f32 %v70, %v141
    %v145 = vmul.f32 %v71, %v141
    %v146 = vadd.f32 %v136, %v142
    %v147 = vadd.f32 %v137, %v143
    %v148 = vadd.f32 %v138, %v144
    %v149 = vadd.f32 %v139, %v145
    %s150 = sld [smem:[#allocation6 + $0x1]]
    %v151 = vstv %s150
    %v152 = vadd.f32 %v146, %v151
    %v153 = vadd.f32 %v147, %v151
    %v154 = vadd.f32 %v148, %v151
    %v155 = vadd.f32 %v149, %v151
    %s156 = sld [smem:[#allocation2 + $0x100]]
    %v157 = vstv %s156
    %v158 = vmul.f32 %v56, %v157
    %v159 = vmul.f32 %v57, %v157
    %v160 = vmul.f32 %v64, %v157
    %v161 = vmul.f32 %v65, %v157
    %s162 = sld [smem:[#allocation2 + $0x101]]
    %v163 = vstv %s162
    %v164 = vmul.f32 %v58, %v163
    %v165 = vmul.f32 %v59, %v163
    %v166 = vmul.f32 %v66, %v163
    %v167 = vmul.f32 %v67, %v163
    %v168 = vadd.f32 %v158, %v164
    %v169 = vadd.f32 %v159, %v165
    %v170 = vadd.f32 %v160, %v166
    %v171 = vadd.f32 %v161, %v167
    %s172 = sld [smem:[#allocation2 + $0x102]]
    %v173 = vstv %s172
    %v174 = vmul.f32 %v60, %v173
    %v175 = vmul.f32 %v61, %v173
    %v176 = vmul.f32 %v68, %v173
    %v177 = vmul.f32 %v69, %v173
    %v178 = vadd.f32 %v168, %v174
    %v179 = vadd.f32 %v169, %v175
    %v180 = vadd.f32 %v170, %v176
    %v181 = vadd.f32 %v171, %v177
    %s182 = sld [smem:[#allocation2 + $0x103]]
    %v183 = vstv %s182
    %v184 = vmul.f32 %v62, %v183
    %v185 = vmul.f32 %v63, %v183
    %v186 = vmul.f32 %v70, %v183
    %v187 = vmul.f32 %v71, %v183
    %v188 = vadd.f32 %v178, %v184
    %v189 = vadd.f32 %v179, %v185
    %v190 = vadd.f32 %v180, %v186
    %v191 = vadd.f32 %v181, %v187
    %s192 = sld [smem:[#allocation6 + $0x2]]
    %v193 = vstv %s192
    %v194 = vadd.f32 %v188, %v193
    %v195 = vadd.f32 %v189, %v193
    %v196 = vadd.f32 %v190, %v193
    %v197 = vadd.f32 %v191, %v193
    %s198 = sld [smem:[#allocation2 + $0x180]]
    %v199 = vstv %s198
    %v200 = vmul.f32 %v56, %v199
    %v201 = vmul.f32 %v57, %v199
    %v202 = vmul.f32 %v64, %v199
    %v203 = vmul.f32 %v65, %v199
    %s204 = sld [smem:[#allocation2 + $0x181]]
    %v205 = vstv %s204
    %v206 = vmul.f32 %v58, %v205
    %v207 = vmul.f32 %v59, %v205
    %v208 = vmul.f32 %v66, %v205
    %v209 = vmul.f32 %v67, %v205
    %v210 = vadd.f32 %v200, %v206
    %v211 = vadd.f32 %v201, %v207
    %v212 = vadd.f32 %v202, %v208
    %v213 = vadd.f32 %v203, %v209
    %s214 = sld [smem:[#allocation2 + $0x182]]
    %v215 = vstv %s214
    %v216 = vmul.f32 %v60, %v215
    %v217 = vmul.f32 %v61, %v215
    %v218 = vmul.f32 %v68, %v215
    %v219 = vmul.f32 %v69, %v215
    %v220 = vadd.f32 %v210, %v216
    %v221 = vadd.f32 %v211, %v217
    %v222 = vadd.f32 %v212, %v218
    %v223 = vadd.f32 %v213, %v219
    %s224 = sld [smem:[#allocation2 + $0x183]]
    %v225 = vstv %s224
    %v226 = vmul.f32 %v62, %v225
    %v227 = vmul.f32 %v63, %v225
    %v228 = vmul.f32 %v70, %v225
    %v229 = vmul.f32 %v71, %v225
    %v230 = vadd.f32 %v220, %v226
    %v231 = vadd.f32 %v221, %v227
    %v232 = vadd.f32 %v222, %v228
    %v233 = vadd.f32 %v223, %v229
    %s234 = sld [smem:[#allocation6 + $0x3]]
    %v235 = vstv %s234
    %v236 = vadd.f32 %v230, %v235
    %v237 = vadd.f32 %v231, %v235
    %v238 = vadd.f32 %v232, %v235
    %v239 = vadd.f32 %v233, %v235
    %s240 = sld [smem:[#allocation2 + $0x200]]
    %v241 = vstv %s240
    %v242 = vmul.f32 %v56, %v241
    %v243 = vmul.f32 %v57, %v241
    %v244 = vmul.f32 %v64, %v241
    %v245 = vmul.f32 %v65, %v241
    %s246 = sld [smem:[#allocation2 + $0x201]]
    %v247 = vstv %s246
    %v248 = vmul.f32 %v58, %v247
    %v249 = vmul.f32 %v59, %v247
    %v250 = vmul.f32 %v66, %v247
    %v251 = vmul.f32 %v67, %v247
    %v252 = vadd.f32 %v242, %v248
    %v253 = vadd.f32 %v243, %v249
    %v254 = vadd.f32 %v244, %v250
    %v255 = vadd.f32 %v245, %v251
    %s256 = sld [smem:[#allocation2 + $0x202]]
    %v257 = vstv %s256
    %v258 = vmul.f32 %v60, %v257
    %v259 = vmul.f32 %v61, %v257
    %v260 = vmul.f32 %v68, %v257
    %v261 = vmul.f32 %v69, %v257
    %v262 = vadd.f32 %v252, %v258
    %v263 = vadd.f32 %v253, %v259
    %v264 = vadd.f32 %v254, %v260
    %v265 = vadd.f32 %v255, %v261
    %s266 = sld [smem:[#allocation2 + $0x203]]
    %v267 = vstv %s266
    %v268 = vmul.f32 %v62, %v267
    %v269 = vmul.f32 %v63, %v267
    %v270 = vmul.f32 %v70, %v267
    %v271 = vmul.f32 %v71, %v267
    %v272 = vadd.f32 %v262, %v268
    %v273 = vadd.f32 %v263, %v269
    %v274 = vadd.f32 %v264, %v270
    %v275 = vadd.f32 %v265, %v271
    %s276 = sld [smem:[#allocation6 + $0x80]]
    %v277 = vstv %s276
    %v278 = vadd.f32 %v272, %v277
    %v279 = vadd.f32 %v273, %v277
    %v280 = vadd.f32 %v274, %v277
    %v281 = vadd.f32 %v275, %v277
    %s282 = sld [smem:[#allocation2 + $0x280]]
    %v283 = vstv %s282
    %v284 = vmul.f32 %v56, %v283
    %v285 = vmul.f32 %v57, %v283
    %v286 = vmul.f32 %v64, %v283
    %v287 = vmul.f32 %v65, %v283
    %s288 = sld [smem:[#allocation2 + $0x281]]
    %v289 = vstv %s288
    %v290 = vmul.f32 %v58, %v289
    %v291 = vmul.f32 %v59, %v289
    %v292 = vmul.f32 %v66, %v289
    %v293 = vmul.f32 %v67, %v289
    %v294 = vadd.f32 %v284, %v290
    %v295 = vadd.f32 %v285, %v291
    %v296 = vadd.f32 %v286, %v292
    %v297 = vadd.f32 %v287, %v293
    %s298 = sld [smem:[#allocation2 + $0x282]]
    %v299 = vstv %s298
    %v300 = vmul.f32 %v60, %v299
    %v301 = vmul.f32 %v61, %v299
    %v302 = vmul.f32 %v68, %v299
    %v303 = vmul.f32 %v69, %v299
    %v304 = vadd.f32 %v294, %v300
    %v305 = vadd.f32 %v295, %v301
    %v306 = vadd.f32 %v296, %v302
    %v307 = vadd.f32 %v297, %v303
    %s308 = sld [smem:[#allocation2 + $0x283]]
    %v309 = vstv %s308
    %v310 = vmul.f32 %v62, %v309
    %v311 = vmul.f32 %v63, %v309
    %v312 = vmul.f32 %v70, %v309
    %v313 = vmul.f32 %v71, %v309
    %v314 = vadd.f32 %v304, %v310
    %v315 = vadd.f32 %v305, %v311
    %v316 = vadd.f32 %v306, %v312
    %v317 = vadd.f32 %v307, %v313
    %s318 = sld [smem:[#allocation6 + $0x81]]
    %v319 = vstv %s318
    %v320 = vadd.f32 %v314, %v319
    %v321 = vadd.f32 %v315, %v319
    %v322 = vadd.f32 %v316, %v319
    %v323 = vadd.f32 %v317, %v319
    %s324 = sld [smem:[#allocation2 + $0x300]]
    %v325 = vstv %s324
    %v326 = vmul.f32 %v56, %v325
    %v327 = vmul.f32 %v57, %v325
    %v328 = vmul.f32 %v64, %v325
    %v329 = vmul.f32 %v65, %v325
    %s330 = sld [smem:[#allocation2 + $0x301]]
    %v331 = vstv %s330
    %v332 = vmul.f32 %v58, %v331
    %v333 = vmul.f32 %v59, %v331
    %v334 = vmul.f32 %v66, %v331
    %v335 = vmul.f32 %v67, %v331
    %v336 = vadd.f32 %v326, %v332
    %v337 = vadd.f32 %v327, %v333
    %v338 = vadd.f32 %v328, %v334
    %v339 = vadd.f32 %v329, %v335
    %s340 = sld [smem:[#allocation2 + $0x302]]
    %v341 = vstv %s340
    %v342 = vmul.f32 %v60, %v341
    %v343 = vmul.f32 %v61, %v341
    %v344 = vmul.f32 %v68, %v341
    %v345 = vmul.f32 %v69, %v341
    %v346 = vadd.f32 %v336, %v342
    %v347 = vadd.f32 %v337, %v343
    %v348 = vadd.f32 %v338, %v344
    %v349 = vadd.f32 %v339, %v345
    %s350 = sld [smem:[#allocation2 + $0x303]]
    %v351 = vstv %s350
    %v352 = vmul.f32 %v62, %v351
    %v353 = vmul.f32 %v63, %v351
    %v354 = vmul.f32 %v70, %v351
    %v355 = vmul.f32 %v71, %v351
    %v356 = vadd.f32 %v346, %v352
    %v357 = vadd.f32 %v347, %v353
    %v358 = vadd.f32 %v348, %v354
    %v359 = vadd.f32 %v349, %v355
    %s360 = sld [smem:[#allocation6 + $0x82]]
    %v361 = vstv %s360
    %v362 = vadd.f32 %v356, %v361
    %v363 = vadd.f32 %v357, %v361
    %v364 = vadd.f32 %v358, %v361
    %v365 = vadd.f32 %v359, %v361
    %s366 = sld [smem:[#allocation2 + $0x380]]
    %v367 = vstv %s366
    %v368 = vmul.f32 %v56, %v367
    %v369 = vmul.f32 %v57, %v367
    %v370 = vmul.f32 %v64, %v367
    %v371 = vmul.f32 %v65, %v367
    %s372 = sld [smem:[#allocation2 + $0x381]]
    %v373 = vstv %s372
    %v374 = vmul.f32 %v58, %v373
    %v375 = vmul.f32 %v59, %v373
    %v376 = vmul.f32 %v66, %v373
    %v377 = vmul.f32 %v67, %v373
    %v378 = vadd.f32 %v368, %v374
    %v379 = vadd.f32 %v369, %v375
    %v380 = vadd.f32 %v370, %v376
    %v381 = vadd.f32 %v371, %v377
    %s382 = sld [smem:[#allocation2 + $0x382]]
    %v383 = vstv %s382
    %v384 = vmul.f32 %v60, %v383
    %v385 = vmul.f32 %v61, %v383
    %v386 = vmul.f32 %v68, %v383
    %v387 = vmul.f32 %v69, %v383
    %v388 = vadd.f32 %v378, %v384
    %v389 = vadd.f32 %v379, %v385
    %v390 = vadd.f32 %v380, %v386
    %v391 = vadd.f32 %v381, %v387
    %s392 = sld [smem:[#allocation2 + $0x383]]
    %v393 = vstv %s392
    %v394 = vmul.f32 %v62, %v393
    %v395 = vmul.f32 %v63, %v393
    %v396 = vmul.f32 %v70, %v393
    %v397 = vmul.f32 %v71, %v393
    %v398 = vadd.f32 %v388, %v394
    %v399 = vadd.f32 %v389, %v395
    %v400 = vadd.f32 %v390, %v396
    %v401 = vadd.f32 %v391, %v397
    %s402 = sld [smem:[#allocation6 + $0x83]]
    %v403 = vstv %s402
    %v404 = vadd.f32 %v398, %v403
    %v405 = vadd.f32 %v399, %v403
    %v406 = vadd.f32 %v400, %v403
    %v407 = vadd.f32 %v401, %v403
    %s408 = sld [smem:[#allocation2 + $0x400]]
    %v409 = vstv %s408
    %v410 = vmul.f32 %v56, %v409
    %v411 = vmul.f32 %v57, %v409
    %v412 = vmul.f32 %v64, %v409
    %v413 = vmul.f32 %v65, %v409
    %s414 = sld [smem:[#allocation2 + $0x401]]
    %v415 = vstv %s414
    %v416 = vmul.f32 %v58, %v415
    %v417 = vmul.f32 %v59, %v415
    %v418 = vmul.f32 %v66, %v415
    %v419 = vmul.f32 %v67, %v415
    %v420 = vadd.f32 %v410, %v416
    %v421 = vadd.f32 %v411, %v417
    %v422 = vadd.f32 %v412, %v418
    %v423 = vadd.f32 %v413, %v419
    %s424 = sld [smem:[#allocation2 + $0x402]]
    %v425 = vstv %s424
    %v426 = vmul.f32 %v60, %v425
    %v427 = vmul.f32 %v61, %v425
    %v428 = vmul.f32 %v68, %v425
    %v429 = vmul.f32 %v69, %v425
    %v430 = vadd.f32 %v420, %v426
    %v431 = vadd.f32 %v421, %v427
    %v432 = vadd.f32 %v422, %v428
    %v433 = vadd.f32 %v423, %v429
    %s434 = sld [smem:[#allocation2 + $0x403]]
    %v435 = vstv %s434
    %v436 = vmul.f32 %v62, %v435
    %v437 = vmul.f32 %v63, %v435
    %v438 = vmul.f32 %v70, %v435
    %v439 = vmul.f32 %v71, %v435
    %v440 = vadd.f32 %v430, %v436
    %v441 = vadd.f32 %v431, %v437
    %v442 = vadd.f32 %v432, %v438
    %v443 = vadd.f32 %v433, %v439
    %s444 = sld [smem:[#allocation6 + $0x100]]
    %v445 = vstv %s444
    %v446 = vadd.f32 %v440, %v445
    %v447 = vadd.f32 %v441, %v445
    %v448 = vadd.f32 %v442, %v445
    %v449 = vadd.f32 %v443, %v445
    %s450 = sld [smem:[#allocation2 + $0x480]]
    %v451 = vstv %s450
    %v452 = vmul.f32 %v56, %v451
    %v453 = vmul.f32 %v57, %v451
    %v454 = vmul.f32 %v64, %v451
    %v455 = vmul.f32 %v65, %v451
    %s456 = sld [smem:[#allocation2 + $0x481]]
    %v457 = vstv %s456
    %v458 = vmul.f32 %v58, %v457
    %v459 = vmul.f32 %v59, %v457
    %v460 = vmul.f32 %v66, %v457
    %v461 = vmul.f32 %v67, %v457
    %v462 = vadd.f32 %v452, %v458
    %v463 = vadd.f32 %v453, %v459
    %v464 = vadd.f32 %v454, %v460
    %v465 = vadd.f32 %v455, %v461
    %s466 = sld [smem:[#allocation2 + $0x482]]
    %v467 = vstv %s466
    %v468 = vmul.f32 %v60, %v467
    %v469 = vmul.f32 %v61, %v467
    %v470 = vmul.f32 %v68, %v467
    %v471 = vmul.f32 %v69, %v467
    %v472 = vadd.f32 %v462, %v468
    %v473 = vadd.f32 %v463, %v469
    %v474 = vadd.f32 %v464, %v470
    %v475 = vadd.f32 %v465, %v471
    %s476 = sld [smem:[#allocation2 + $0x483]]
    %v477 = vstv %s476
    %v478 = vmul.f32 %v62, %v477
    %v479 = vmul.f32 %v63, %v477
    %v480 = vmul.f32 %v70, %v477
    %v481 = vmul.f32 %v71, %v477
    %v482 = vadd.f32 %v472, %v478
    %v483 = vadd.f32 %v473, %v479
    %v484 = vadd.f32 %v474, %v480
    %v485 = vadd.f32 %v475, %v481
    %s486 = sld [smem:[#allocation6 + $0x101]]
    %v487 = vstv %s486
    %v488 = vadd.f32 %v482, %v487
    %v489 = vadd.f32 %v483, %v487
    %v490 = vadd.f32 %v484, %v487
    %v491 = vadd.f32 %v485, %v487
    %s492 = sld [smem:[#allocation2 + $0x500]]
    %v493 = vstv %s492
    %v494 = vmul.f32 %v56, %v493
    %v495 = vmul.f32 %v57, %v493
    %v496 = vmul.f32 %v64, %v493
    %v497 = vmul.f32 %v65, %v493
    %s498 = sld [smem:[#allocation2 + $0x501]]
    %v499 = vstv %s498
    %v500 = vmul.f32 %v58, %v499
    %v501 = vmul.f32 %v59, %v499
    %v502 = vmul.f32 %v66, %v499
    %v503 = vmul.f32 %v67, %v499
    %v504 = vadd.f32 %v494, %v500
    %v505 = vadd.f32 %v495, %v501
    %v506 = vadd.f32 %v496, %v502
    %v507 = vadd.f32 %v497, %v503
    %s508 = sld [smem:[#allocation2 + $0x502]]
    %v509 = vstv %s508
    %v510 = vmul.f32 %v60, %v509
    %v511 = vmul.f32 %v61, %v509
    %v512 = vmul.f32 %v68, %v509
    %v513 = vmul.f32 %v69, %v509
    %v514 = vadd.f32 %v504, %v510
    %v515 = vadd.f32 %v505, %v511
    %v516 = vadd.f32 %v506, %v512
    %v517 = vadd.f32 %v507, %v513
    %s518 = sld [smem:[#allocation2 + $0x503]]
    %v519 = vstv %s518
    %v520 = vmul.f32 %v62, %v519
    %v521 = vmul.f32 %v63, %v519
    %v522 = vmul.f32 %v70, %v519
    %v523 = vmul.f32 %v71, %v519
    %v524 = vadd.f32 %v514, %v520
    %v525 = vadd.f32 %v515, %v521
    %v526 = vadd.f32 %v516, %v522
    %v527 = vadd.f32 %v517, %v523
    %s528 = sld [smem:[#allocation6 + $0x102]]
    %v529 = vstv %s528
    %v530 = vadd.f32 %v524, %v529
    %v531 = vadd.f32 %v525, %v529
    %v532 = vadd.f32 %v526, %v529
    %v533 = vadd.f32 %v527, %v529
    %s534 = sld [smem:[#allocation2 + $0x580]]
    %v535 = vstv %s534
    %v536 = vmul.f32 %v56, %v535
    %v537 = vmul.f32 %v57, %v535
    %v538 = vmul.f32 %v64, %v535
    %v539 = vmul.f32 %v65, %v535
    %s540 = sld [smem:[#allocation2 + $0x581]]
    %v541 = vstv %s540
    %v542 = vmul.f32 %v58, %v541
    %v543 = vmul.f32 %v59, %v541
    %v544 = vmul.f32 %v66, %v541
    %v545 = vmul.f32 %v67, %v541
    %v546 = vadd.f32 %v536, %v542
    %v547 = vadd.f32 %v537, %v543
    %v548 = vadd.f32 %v538, %v544
    %v549 = vadd.f32 %v539, %v545
    %s550 = sld [smem:[#allocation2 + $0x582]]
    %v551 = vstv %s550
    %v552 = vmul.f32 %v60, %v551
    %v553 = vmul.f32 %v61, %v551
    %v554 = vmul.f32 %v68, %v551
    %v555 = vmul.f32 %v69, %v551
    %v556 = vadd.f32 %v546, %v552
    %v557 = vadd.f32 %v547, %v553
    %v558 = vadd.f32 %v548, %v554
    %v559 = vadd.f32 %v549, %v555
    %s560 = sld [smem:[#allocation2 + $0x583]]
    %v561 = vstv %s560
    %v562 = vmul.f32 %v62, %v561
    %v563 = vmul.f32 %v63, %v561
    %v564 = vmul.f32 %v70, %v561
    %v565 = vmul.f32 %v71, %v561
    %v566 = vadd.f32 %v556, %v562
    %v567 = vadd.f32 %v557, %v563
    %v568 = vadd.f32 %v558, %v564
    %v569 = vadd.f32 %v559, %v565
    %s570 = sld [smem:[#allocation6 + $0x103]]
    %v571 = vstv %s570
    %v572 = vadd.f32 %v566, %v571
    %v573 = vadd.f32 %v567, %v571
    %v574 = vadd.f32 %v568, %v571
    %v575 = vadd.f32 %v569, %v571
    %576 = vmatprep.subr.mxu0 %v321
    %577 = vmatpush1.xpose.msra.mxu0 %v320
    %578 = vmatprep.subr.mxu0 0.0
    %579 = vmatpush1.xpose.msra.mxu0 0.0
    %580 = vmatprep.subr.mxu0 0.0
    %581 = vmatpush1.xpose.msra.mxu0 0.0
    %582 = vmatprep.subr.mxu0 0.0
    %583 = vmatpush1.xpose.msra.mxu0 0.0
    %584 = vmatprep.subr.mxu0 0.0
    %585 = vmatpush1.xpose.msra.mxu0 0.0
    %586 = vmatprep.subr.mxu0 0.0
    %587 = vmatpush1.xpose.msra.mxu0 0.0
    %588 = vmatprep.subr.mxu0 0.0
    %589 = vmatpush1.xpose.msra.mxu0 0.0
    %590 = vmatprep.subr.mxu0 0.0
    %591 = vmatpush1.xpose.msra.mxu0 0.0
    %592 = vmatprep.subr.mxu0 0.0
    %593 = vmatpush1.xpose.msra.mxu0 0.0
    %594 = vmatprep.subr.mxu0 0.0
    %595 = vmatpush1.xpose.msra.mxu0 0.0
    %596 = vmatprep.subr.mxu0 0.0
    %597 = vmatpush1.xpose.msra.mxu0 0.0
    %598 = vmatprep.subr.mxu0 0.0
    %599 = vmatpush1.xpose.msra.mxu0 0.0
    %600 = vmatprep.subr.mxu0 0.0
    %601 = vmatpush1.xpose.msra.mxu0 0.0
    %602 = vmatprep.subr.mxu0 0.0
    %603 = vmatpush1.xpose.msra.mxu0 0.0
    %604 = vmatprep.subr.mxu0 0.0
    %605 = vmatpush1.xpose.msra.mxu0 0.0
    %606 = vmatprep.subr.mxu0 0.0
    %607 = vmatpush1.xpose.msra.mxu0 0.0
    %608 = vmatprep.subr.mxu0 0.0
    %609 = vmatpush1.xpose.msra.mxu0 0.0
    %610 = vmatprep.subr.mxu0 0.0
    %611 = vmatpush1.xpose.msra.mxu0 0.0
    %612 = vmatprep.subr.mxu0 0.0
    %613 = vmatpush1.xpose.msra.mxu0 0.0
    %614 = vmatprep.subr.mxu0 0.0
    %615 = vmatpush1.xpose.msra.mxu0 0.0
    %616 = vmatprep.subr.mxu0 0.0
    %617 = vmatpush1.xpose.msra.mxu0 0.0
    %618 = vmatprep.subr.mxu0 0.0
    %619 = vmatpush1.xpose.msra.mxu0 0.0
    %620 = vmatprep.subr.mxu0 0.0
    %621 = vmatpush1.xpose.msra.mxu0 0.0
    %622 = vmatprep.subr.mxu0 0.0
    %623 = vmatpush1.xpose.msra.mxu0 0.0
    %624 = vmatprep.subr.mxu0 0.0
    %625 = vmatpush1.xpose.msra.mxu0 0.0
    %626 = vmatprep.subr.mxu0 0.0
    %627 = vmatpush1.xpose.msra.mxu0 0.0
    %628 = vmatprep.subr.mxu0 0.0
    %629 = vmatpush1.xpose.msra.mxu0 0.0
    %630 = vmatprep.subr.mxu0 0.0
    %631 = vmatpush1.xpose.msra.mxu0 0.0
    %632 = vmatprep.subr.mxu0 0.0
    %633 = vmatpush1.xpose.msra.mxu0 0.0
    %634 = vmatprep.subr.mxu0 0.0
    %635 = vmatpush1.xpose.msra.mxu0 0.0
    %636 = vmatprep.subr.mxu0 0.0
    %637 = vmatpush1.xpose.msra.mxu0 0.0
    %638 = vmatprep.subr.mxu0 0.0
    %639 = vmatpush1.xpose.msra.mxu0 0.0
    %640 = vmatprep.mubr.f32.mxu0 %v489
    %641 = vmatmul.mubr.f32.gmra.mrb[0].mxu0 %v488
    %v642 = vpop.f32.mrb[0].mxu0
    %v643 = vadd.f32 0.0, %v642
    %v644 = vpop.f32.mrb[0].mxu0
    %645 = vdwg.mxu0
    %646 = vmatprep.subr.mxu0 %v323
    %647 = vmatpush1.xpose.msra.mxu0 %v322
    %648 = vmatprep.subr.mxu0 0.0
    %649 = vmatpush1.xpose.msra.mxu0 0.0
    %650 = vmatprep.subr.mxu0 0.0
    %651 = vmatpush1.xpose.msra.mxu0 0.0
    %652 = vmatprep.subr.mxu0 0.0
    %653 = vmatpush1.xpose.msra.mxu0 0.0
    %654 = vmatprep.subr.mxu0 0.0
    %655 = vmatpush1.xpose.msra.mxu0 0.0
    %656 = vmatprep.subr.mxu0 0.0
    %657 = vmatpush1.xpose.msra.mxu0 0.0
    %658 = vmatprep.subr.mxu0 0.0
    %659 = vmatpush1.xpose.msra.mxu0 0.0
    %660 = vmatprep.subr.mxu0 0.0
    %661 = vmatpush1.xpose.msra.mxu0 0.0
    %662 = vmatprep.subr.mxu0 0.0
    %663 = vmatpush1.xpose.msra.mxu0 0.0
    %664 = vmatprep.subr.mxu0 0.0
    %665 = vmatpush1.xpose.msra.mxu0 0.0
    %666 = vmatprep.subr.mxu0 0.0
    %667 = vmatpush1.xpose.msra.mxu0 0.0
    %668 = vmatprep.subr.mxu0 0.0
    %669 = vmatpush1.xpose.msra.mxu0 0.0
    %670 = vmatprep.subr.mxu0 0.0
    %671 = vmatpush1.xpose.msra.mxu0 0.0
    %672 = vmatprep.subr.mxu0 0.0
    %673 = vmatpush1.xpose.msra.mxu0 0.0
    %674 = vmatprep.subr.mxu0 0.0
    %675 = vmatpush1.xpose.msra.mxu0 0.0
    %676 = vmatprep.subr.mxu0 0.0
    %677 = vmatpush1.xpose.msra.mxu0 0.0
    %678 = vmatprep.subr.mxu0 0.0
    %679 = vmatpush1.xpose.msra.mxu0 0.0
    %680 = vmatprep.subr.mxu0 0.0
    %681 = vmatpush1.xpose.msra.mxu0 0.0
    %682 = vmatprep.subr.mxu0 0.0
    %683 = vmatpush1.xpose.msra.mxu0 0.0
    %684 = vmatprep.subr.mxu0 0.0
    %685 = vmatpush1.xpose.msra.mxu0 0.0
    %686 = vmatprep.subr.mxu0 0.0
    %687 = vmatpush1.xpose.msra.mxu0 0.0
    %688 = vmatprep.subr.mxu0 0.0
    %689 = vmatpush1.xpose.msra.mxu0 0.0
    %690 = vmatprep.subr.mxu0 0.0
    %691 = vmatpush1.xpose.msra.mxu0 0.0
    %692 = vmatprep.subr.mxu0 0.0
    %693 = vmatpush1.xpose.msra.mxu0 0.0
    %694 = vmatprep.subr.mxu0 0.0
    %695 = vmatpush1.xpose.msra.mxu0 0.0
    %696 = vmatprep.subr.mxu0 0.0
    %697 = vmatpush1.xpose.msra.mxu0 0.0
    %698 = vmatprep.subr.mxu0 0.0
    %699 = vmatpush1.xpose.msra.mxu0 0.0
    %700 = vmatprep.subr.mxu0 0.0
    %701 = vmatpush1.xpose.msra.mxu0 0.0
    %702 = vmatprep.subr.mxu0 0.0
    %703 = vmatpush1.xpose.msra.mxu0 0.0
    %704 = vmatprep.subr.mxu0 0.0
    %705 = vmatpush1.xpose.msra.mxu0 0.0
    %706 = vmatprep.subr.mxu0 0.0
    %707 = vmatpush1.xpose.msra.mxu0 0.0
    %708 = vmatprep.subr.mxu0 0.0
    %709 = vmatpush1.xpose.msra.mxu0 0.0
    %710 = vmatprep.mubr.f32.mxu0 %v491
    %711 = vmatmul.mubr.f32.gmra.mrb[0].mxu0 %v490
    %v712 = vpop.f32.mrb[0].mxu0
    %v713 = vadd.f32 0.0, %v712
    %v714 = vpop.f32.mrb[0].mxu0
    %715 = vdwg.mxu0
    %716 = vmatprep.subr.mxu0 %v279
    %717 = vmatpush1.xpose.msra.mxu0 %v278
    %718 = vmatprep.subr.mxu0 0.0
    %719 = vmatpush1.xpose.msra.mxu0 0.0
    %720 = vmatprep.subr.mxu0 0.0
    %721 = vmatpush1.xpose.msra.mxu0 0.0
    %722 = vmatprep.subr.mxu0 0.0
    %723 = vmatpush1.xpose.msra.mxu0 0.0
    %724 = vmatprep.subr.mxu0 0.0
    %725 = vmatpush1.xpose.msra.mxu0 0.0
    %726 = vmatprep.subr.mxu0 0.0
    %727 = vmatpush1.xpose.msra.mxu0 0.0
    %728 = vmatprep.subr.mxu0 0.0
    %729 = vmatpush1.xpose.msra.mxu0 0.0
    %730 = vmatprep.subr.mxu0 0.0
    %731 = vmatpush1.xpose.msra.mxu0 0.0
    %732 = vmatprep.subr.mxu0 0.0
    %733 = vmatpush1.xpose.msra.mxu0 0.0
    %734 = vmatprep.subr.mxu0 0.0
    %735 = vmatpush1.xpose.msra.mxu0 0.0
    %736 = vmatprep.subr.mxu0 0.0
    %737 = vmatpush1.xpose.msra.mxu0 0.0
    %738 = vmatprep.subr.mxu0 0.0
    %739 = vmatpush1.xpose.msra.mxu0 0.0
    %740 = vmatprep.subr.mxu0 0.0
    %741 = vmatpush1.xpose.msra.mxu0 0.0
    %742 = vmatprep.subr.mxu0 0.0
    %743 = vmatpush1.xpose.msra.mxu0 0.0
    %744 = vmatprep.subr.mxu0 0.0
    %745 = vmatpush1.xpose.msra.mxu0 0.0
    %746 = vmatprep.subr.mxu0 0.0
    %747 = vmatpush1.xpose.msra.mxu0 0.0
    %748 = vmatprep.subr.mxu0 0.0
    %749 = vmatpush1.xpose.msra.mxu0 0.0
    %750 = vmatprep.subr.mxu0 0.0
    %751 = vmatpush1.xpose.msra.mxu0 0.0
    %752 = vmatprep.subr.mxu0 0.0
    %753 = vmatpush1.xpose.msra.mxu0 0.0
    %754 = vmatprep.subr.mxu0 0.0
    %755 = vmatpush1.xpose.msra.mxu0 0.0
    %756 = vmatprep.subr.mxu0 0.0
    %757 = vmatpush1.xpose.msra.mxu0 0.0
    %758 = vmatprep.subr.mxu0 0.0
    %759 = vmatpush1.xpose.msra.mxu0 0.0
    %760 = vmatprep.subr.mxu0 0.0
    %761 = vmatpush1.xpose.msra.mxu0 0.0
    %762 = vmatprep.subr.mxu0 0.0
    %763 = vmatpush1.xpose.msra.mxu0 0.0
    %764 = vmatprep.subr.mxu0 0.0
    %765 = vmatpush1.xpose.msra.mxu0 0.0
    %766 = vmatprep.subr.mxu0 0.0
    %767 = vmatpush1.xpose.msra.mxu0 0.0
    %768 = vmatprep.subr.mxu0 0.0
    %769 = vmatpush1.xpose.msra.mxu0 0.0
    %770 = vmatprep.subr.mxu0 0.0
    %771 = vmatpush1.xpose.msra.mxu0 0.0
    %772 = vmatprep.subr.mxu0 0.0
    %773 = vmatpush1.xpose.msra.mxu0 0.0
    %774 = vmatprep.subr.mxu0 0.0
    %775 = vmatpush1.xpose.msra.mxu0 0.0
    %776 = vmatprep.subr.mxu0 0.0
    %777 = vmatpush1.xpose.msra.mxu0 0.0
    %778 = vmatprep.subr.mxu0 0.0
    %779 = vmatpush1.xpose.msra.mxu0 0.0
    %780 = vmatprep.mubr.f32.mxu0 %v447
    %781 = vmatmul.mubr.f32.gmra.mrb[0].mxu0 %v446
    %v782 = vpop.f32.mrb[0].mxu0
    %v783 = vadd.f32 %v643, %v782
    %v784 = vpop.f32.mrb[0].mxu0
    %785 = vdwg.mxu0
    %786 = vmatprep.subr.mxu0 %v281
    %787 = vmatpush1.xpose.msra.mxu0 %v280
    %788 = vmatprep.subr.mxu0 0.0
    %789 = vmatpush1.xpose.msra.mxu0 0.0
    %790 = vmatprep.subr.mxu0 0.0
    %791 = vmatpush1.xpose.msra.mxu0 0.0
    %792 = vmatprep.subr.mxu0 0.0
    %793 = vmatpush1.xpose.msra.mxu0 0.0
    %794 = vmatprep.subr.mxu0 0.0
    %795 = vmatpush1.xpose.msra.mxu0 0.0
    %796 = vmatprep.subr.mxu0 0.0
    %797 = vmatpush1.xpose.msra.mxu0 0.0
    %798 = vmatprep.subr.mxu0 0.0
    %799 = vmatpush1.xpose.msra.mxu0 0.0
    %800 = vmatprep.subr.mxu0 0.0
    %801 = vmatpush1.xpose.msra.mxu0 0.0
    %802 = vmatprep.subr.mxu0 0.0
    %803 = vmatpush1.xpose.msra.mxu0 0.0
    %804 = vmatprep.subr.mxu0 0.0
    %805 = vmatpush1.xpose.msra.mxu0 0.0
    %806 = vmatprep.subr.mxu0 0.0
    %807 = vmatpush1.xpose.msra.mxu0 0.0
    %808 = vmatprep.subr.mxu0 0.0
    %809 = vmatpush1.xpose.msra.mxu0 0.0
    %810 = vmatprep.subr.mxu0 0.0
    %811 = vmatpush1.xpose.msra.mxu0 0.0
    %812 = vmatprep.subr.mxu0 0.0
    %813 = vmatpush1.xpose.msra.mxu0 0.0
    %814 = vmatprep.subr.mxu0 0.0
    %815 = vmatpush1.xpose.msra.mxu0 0.0
    %816 = vmatprep.subr.mxu0 0.0
    %817 = vmatpush1.xpose.msra.mxu0 0.0
    %818 = vmatprep.subr.mxu0 0.0
    %819 = vmatpush1.xpose.msra.mxu0 0.0
    %820 = vmatprep.subr.mxu0 0.0
    %821 = vmatpush1.xpose.msra.mxu0 0.0
    %822 = vmatprep.subr.mxu0 0.0
    %823 = vmatpush1.xpose.msra.mxu0 0.0
    %824 = vmatprep.subr.mxu0 0.0
    %825 = vmatpush1.xpose.msra.mxu0 0.0
    %826 = vmatprep.subr.mxu0 0.0
    %827 = vmatpush1.xpose.msra.mxu0 0.0
    %828 = vmatprep.subr.mxu0 0.0
    %829 = vmatpush1.xpose.msra.mxu0 0.0
    %830 = vmatprep.subr.mxu0 0.0
    %831 = vmatpush1.xpose.msra.mxu0 0.0
    %832 = vmatprep.subr.mxu0 0.0
    %833 = vmatpush1.xpose.msra.mxu0 0.0
    %834 = vmatprep.subr.mxu0 0.0
    %835 = vmatpush1.xpose.msra.mxu0 0.0
    %836 = vmatprep.subr.mxu0 0.0
    %837 = vmatpush1.xpose.msra.mxu0 0.0
    %838 = vmatprep.subr.mxu0 0.0
    %839 = vmatpush1.xpose.msra.mxu0 0.0
    %840 = vmatprep.subr.mxu0 0.0
    %841 = vmatpush1.xpose.msra.mxu0 0.0
    %842 = vmatprep.subr.mxu0 0.0
    %843 = vmatpush1.xpose.msra.mxu0 0.0
    %844 = vmatprep.subr.mxu0 0.0
    %845 = vmatpush1.xpose.msra.mxu0 0.0
    %846 = vmatprep.subr.mxu0 0.0
    %847 = vmatpush1.xpose.msra.mxu0 0.0
    %848 = vmatprep.subr.mxu0 0.0
    %849 = vmatpush1.xpose.msra.mxu0 0.0
    %850 = vmatprep.mubr.f32.mxu0 %v449
    %851 = vmatmul.mubr.f32.gmra.mrb[0].mxu0 %v448
    %v852 = vpop.f32.mrb[0].mxu0
    %v853 = vadd.f32 %v713, %v852
    %v854 = vpop.f32.mrb[0].mxu0
    %855 = vdwg.mxu0
    %856 = vmatprep.subr.mxu0 %v363
    %857 = vmatpush1.xpose.msra.mxu0 %v362
    %858 = vmatprep.subr.mxu0 0.0
    %859 = vmatpush1.xpose.msra.mxu0 0.0
    %860 = vmatprep.subr.mxu0 0.0
    %861 = vmatpush1.xpose.msra.mxu0 0.0
    %862 = vmatprep.subr.mxu0 0.0
    %863 = vmatpush1.xpose.msra.mxu0 0.0
    %864 = vmatprep.subr.mxu0 0.0
    %865 = vmatpush1.xpose.msra.mxu0 0.0
    %866 = vmatprep.subr.mxu0 0.0
    %867 = vmatpush1.xpose.msra.mxu0 0.0
    %868 = vmatprep.subr.mxu0 0.0
    %869 = vmatpush1.xpose.msra.mxu0 0.0
    %870 = vmatprep.subr.mxu0 0.0
    %871 = vmatpush1.xpose.msra.mxu0 0.0
    %872 = vmatprep.subr.mxu0 0.0
    %873 = vmatpush1.xpose.msra.mxu0 0.0
    %874 = vmatprep.subr.mxu0 0.0
    %875 = vmatpush1.xpose.msra.mxu0 0.0
    %876 = vmatprep.subr.mxu0 0.0
    %877 = vmatpush1.xpose.msra.mxu0 0.0
    %878 = vmatprep.subr.mxu0 0.0
    %879 = vmatpush1.xpose.msra.mxu0 0.0
    %880 = vmatprep.subr.mxu0 0.0
    %881 = vmatpush1.xpose.msra.mxu0 0.0
    %882 = vmatprep.subr.mxu0 0.0
    %883 = vmatpush1.xpose.msra.mxu0 0.0
    %884 = vmatprep.subr.mxu0 0.0
    %885 = vmatpush1.xpose.msra.mxu0 0.0
    %886 = vmatprep.subr.mxu0 0.0
    %887 = vmatpush1.xpose.msra.mxu0 0.0
    %888 = vmatprep.subr.mxu0 0.0
    %889 = vmatpush1.xpose.msra.mxu0 0.0
    %890 = vmatprep.subr.mxu0 0.0
    %891 = vmatpush1.xpose.msra.mxu0 0.0
    %892 = vmatprep.subr.mxu0 0.0
    %893 = vmatpush1.xpose.msra.mxu0 0.0
    %894 = vmatprep.subr.mxu0 0.0
    %895 = vmatpush1.xpose.msra.mxu0 0.0
    %896 = vmatprep.subr.mxu0 0.0
    %897 = vmatpush1.xpose.msra.mxu0 0.0
    %898 = vmatprep.subr.mxu0 0.0
    %899 = vmatpush1.xpose.msra.mxu0 0.0
    %900 = vmatprep.subr.mxu0 0.0
    %901 = vmatpush1.xpose.msra.mxu0 0.0
    %902 = vmatprep.subr.mxu0 0.0
    %903 = vmatpush1.xpose.msra.mxu0 0.0
    %904 = vmatprep.subr.mxu0 0.0
    %905 = vmatpush1.xpose.msra.mxu0 0.0
    %906 = vmatprep.subr.mxu0 0.0
    %907 = vmatpush1.xpose.msra.mxu0 0.0
    %908 = vmatprep.subr.mxu0 0.0
    %909 = vmatpush1.xpose.msra.mxu0 0.0
    %910 = vmatprep.subr.mxu0 0.0
    %911 = vmatpush1.xpose.msra.mxu0 0.0
    %912 = vmatprep.subr.mxu0 0.0
    %913 = vmatpush1.xpose.msra.mxu0 0.0
    %914 = vmatprep.subr.mxu0 0.0
    %915 = vmatpush1.xpose.msra.mxu0 0.0
    %916 = vmatprep.subr.mxu0 0.0
    %917 = vmatpush1.xpose.msra.mxu0 0.0
    %918 = vmatprep.subr.mxu0 0.0
    %919 = vmatpush1.xpose.msra.mxu0 0.0
    %920 = vmatprep.mubr.f32.mxu0 %v531
    %921 = vmatmul.mubr.f32.gmra.mrb[0].mxu0 %v530
    %v922 = vpop.f32.mrb[0].mxu0
    %v923 = vadd.f32 0.0, %v922
    %v924 = vpop.f32.mrb[0].mxu0
    %925 = vdwg.mxu0
    %926 = vmatprep.subr.mxu0 %v365
    %927 = vmatpush1.xpose.msra.mxu0 %v364
    %928 = vmatprep.subr.mxu0 0.0
    %929 = vmatpush1.xpose.msra.mxu0 0.0
    %930 = vmatprep.subr.mxu0 0.0
    %931 = vmatpush1.xpose.msra.mxu0 0.0
    %932 = vmatprep.subr.mxu0 0.0
    %933 = vmatpush1.xpose.msra.mxu0 0.0
    %934 = vmatprep.subr.mxu0 0.0
    %935 = vmatpush1.xpose.msra.mxu0 0.0
    %936 = vmatprep.subr.mxu0 0.0
    %937 = vmatpush1.xpose.msra.mxu0 0.0
    %938 = vmatprep.subr.mxu0 0.0
    %939 = vmatpush1.xpose.msra.mxu0 0.0
    %940 = vmatprep.subr.mxu0 0.0
    %941 = vmatpush1.xpose.msra.mxu0 0.0
    %942 = vmatprep.subr.mxu0 0.0
    %943 = vmatpush1.xpose.msra.mxu0 0.0
    %944 = vmatprep.subr.mxu0 0.0
    %945 = vmatpush1.xpose.msra.mxu0 0.0
    %946 = vmatprep.subr.mxu0 0.0
    %947 = vmatpush1.xpose.msra.mxu0 0.0
    %948 = vmatprep.subr.mxu0 0.0
    %949 = vmatpush1.xpose.msra.mxu0 0.0
    %950 = vmatprep.subr.mxu0 0.0
    %951 = vmatpush1.xpose.msra.mxu0 0.0
    %952 = vmatprep.subr.mxu0 0.0
    %953 = vmatpush1.xpose.msra.mxu0 0.0
    %954 = vmatprep.subr.mxu0 0.0
    %955 = vmatpush1.xpose.msra.mxu0 0.0
    %956 = vmatprep.subr.mxu0 0.0
    %957 = vmatpush1.xpose.msra.mxu0 0.0
    %958 = vmatprep.subr.mxu0 0.0
    %959 = vmatpush1.xpose.msra.mxu0 0.0
    %960 = vmatprep.subr.mxu0 0.0
    %961 = vmatpush1.xpose.msra.mxu0 0.0
    %962 = vmatprep.subr.mxu0 0.0
    %963 = vmatpush1.xpose.msra.mxu0 0.0
    %964 = vmatprep.subr.mxu0 0.0
    %965 = vmatpush1.xpose.msra.mxu0 0.0
    %966 = vmatprep.subr.mxu0 0.0
    %967 = vmatpush1.xpose.msra.mxu0 0.0
    %968 = vmatprep.subr.mxu0 0.0
    %969 = vmatpush1.xpose.msra.mxu0 0.0
    %970 = vmatprep.subr.mxu0 0.0
    %971 = vmatpush1.xpose.msra.mxu0 0.0
    %972 = vmatprep.subr.mxu0 0.0
    %973 = vmatpush1.xpose.msra.mxu0 0.0
    %974 = vmatprep.subr.mxu0 0.0
    %975 = vmatpush1.xpose.msra.mxu0 0.0
    %976 = vmatprep.subr.mxu0 0.0
    %977 = vmatpush1.xpose.msra.mxu0 0.0
    %978 = vmatprep.subr.mxu0 0.0
    %979 = vmatpush1.xpose.msra.mxu0 0.0
    %980 = vmatprep.subr.mxu0 0.0
    %981 = vmatpush1.xpose.msra.mxu0 0.0
    %982 = vmatprep.subr.mxu0 0.0
    %983 = vmatpush1.xpose.msra.mxu0 0.0
    %984 = vmatprep.subr.mxu0 0.0
    %985 = vmatpush1.xpose.msra.mxu0 0.0
    %986 = vmatprep.subr.mxu0 0.0
    %987 = vmatpush1.xpose.msra.mxu0 0.0
    %988 = vmatprep.subr.mxu0 0.0
    %989 = vmatpush1.xpose.msra.mxu0 0.0
    %990 = vmatprep.mubr.f32.mxu0 %v533
    %991 = vmatmul.mubr.f32.gmra.mrb[0].mxu0 %v532
    %v992 = vpop.f32.mrb[0].mxu0
    %v993 = vadd.f32 0.0, %v992
    %v994 = vpop.f32.mrb[0].mxu0
    %995 = vdwg.mxu0
    %v996 = vadd.f32 %v783, %v923
    %v997 = vadd.f32 %v853, %v993
    %998 = vmatprep.subr.mxu0 %v405
    %999 = vmatpush1.xpose.msra.mxu0 %v404
    %1000 = vmatprep.subr.mxu0 0.0
    %1001 = vmatpush1.xpose.msra.mxu0 0.0
    %1002 = vmatprep.subr.mxu0 0.0
    %1003 = vmatpush1.xpose.msra.mxu0 0.0
    %1004 = vmatprep.subr.mxu0 0.0
    %1005 = vmatpush1.xpose.msra.mxu0 0.0
    %1006 = vmatprep.subr.mxu0 0.0
    %1007 = vmatpush1.xpose.msra.mxu0 0.0
    %1008 = vmatprep.subr.mxu0 0.0
    %1009 = vmatpush1.xpose.msra.mxu0 0.0
    %1010 = vmatprep.subr.mxu0 0.0
    %1011 = vmatpush1.xpose.msra.mxu0 0.0
    %1012 = vmatprep.subr.mxu0 0.0
    %1013 = vmatpush1.xpose.msra.mxu0 0.0
    %1014 = vmatprep.subr.mxu0 0.0
    %1015 = vmatpush1.xpose.msra.mxu0 0.0
    %1016 = vmatprep.subr.mxu0 0.0
    %1017 = vmatpush1.xpose.msra.mxu0 0.0
    %1018 = vmatprep.subr.mxu0 0.0
    %1019 = vmatpush1.xpose.msra.mxu0 0.0
    %1020 = vmatprep.subr.mxu0 0.0
    %1021 = vmatpush1.xpose.msra.mxu0 0.0
    %1022 = vmatprep.subr.mxu0 0.0
    %1023 = vmatpush1.xpose.msra.mxu0 0.0
    %1024 = vmatprep.subr.mxu0 0.0
    %1025 = vmatpush1.xpose.msra.mxu0 0.0
    %1026 = vmatprep.subr.mxu0 0.0
    %1027 = vmatpush1.xpose.msra.mxu0 0.0
    %1028 = vmatprep.subr.mxu0 0.0
    %1029 = vmatpush1.xpose.msra.mxu0 0.0
    %1030 = vmatprep.subr.mxu0 0.0
    %1031 = vmatpush1.xpose.msra.mxu0 0.0
    %1032 = vmatprep.subr.mxu0 0.0
    %1033 = vmatpush1.xpose.msra.mxu0 0.0
    %1034 = vmatprep.subr.mxu0 0.0
    %1035 = vmatpush1.xpose.msra.mxu0 0.0
    %1036 = vmatprep.subr.mxu0 0.0
    %1037 = vmatpush1.xpose.msra.mxu0 0.0
    %1038 = vmatprep.subr.mxu0 0.0
    %1039 = vmatpush1.xpose.msra.mxu0 0.0
    %1040 = vmatprep.subr.mxu0 0.0
    %1041 = vmatpush1.xpose.msra.mxu0 0.0
    %1042 = vmatprep.subr.mxu0 0.0
    %1043 = vmatpush1.xpose.msra.mxu0 0.0
    %1044 = vmatprep.subr.mxu0 0.0
    %1045 = vmatpush1.xpose.msra.mxu0 0.0
    %1046 = vmatprep.subr.mxu0 0.0
    %1047 = vmatpush1.xpose.msra.mxu0 0.0
    %1048 = vmatprep.subr.mxu0 0.0
    %1049 = vmatpush1.xpose.msra.mxu0 0.0
    %1050 = vmatprep.subr.mxu0 0.0
    %1051 = vmatpush1.xpose.msra.mxu0 0.0
    %1052 = vmatprep.subr.mxu0 0.0
    %1053 = vmatpush1.xpose.msra.mxu0 0.0
    %1054 = vmatprep.subr.mxu0 0.0
    %1055 = vmatpush1.xpose.msra.mxu0 0.0
    %1056 = vmatprep.subr.mxu0 0.0
    %1057 = vmatpush1.xpose.msra.mxu0 0.0
    %1058 = vmatprep.subr.mxu0 0.0
    %1059 = vmatpush1.xpose.msra.mxu0 0.0
    %1060 = vmatprep.subr.mxu0 0.0
    %1061 = vmatpush1.xpose.msra.mxu0 0.0
    %1062 = vmatprep.mubr.f32.mxu0 %v573
    %1063 = vmatmul.mubr.f32.gmra.mrb[0].mxu0 %v572
    %v1064 = vpop.f32.mrb[0].mxu0
    %v1065 = vadd.f32 0.0, %v1064
    %v1066 = vpop.f32.mrb[0].mxu0
    %1067 = vdwg.mxu0
    %1068 = vmatprep.subr.mxu0 %v407
    %1069 = vmatpush1.xpose.msra.mxu0 %v406
    %1070 = vmatprep.subr.mxu0 0.0
    %1071 = vmatpush1.xpose.msra.mxu0 0.0
    %1072 = vmatprep.subr.mxu0 0.0
    %1073 = vmatpush1.xpose.msra.mxu0 0.0
    %1074 = vmatprep.subr.mxu0 0.0
    %1075 = vmatpush1.xpose.msra.mxu0 0.0
    %1076 = vmatprep.subr.mxu0 0.0
    %1077 = vmatpush1.xpose.msra.mxu0 0.0
    %1078 = vmatprep.subr.mxu0 0.0
    %1079 = vmatpush1.xpose.msra.mxu0 0.0
    %1080 = vmatprep.subr.mxu0 0.0
    %1081 = vmatpush1.xpose.msra.mxu0 0.0
    %1082 = vmatprep.subr.mxu0 0.0
    %1083 = vmatpush1.xpose.msra.mxu0 0.0
    %1084 = vmatprep.subr.mxu0 0.0
    %1085 = vmatpush1.xpose.msra.mxu0 0.0
    %1086 = vmatprep.subr.mxu0 0.0
    %1087 = vmatpush1.xpose.msra.mxu0 0.0
    %1088 = vmatprep.subr.mxu0 0.0
    %1089 = vmatpush1.xpose.msra.mxu0 0.0
    %1090 = vmatprep.subr.mxu0 0.0
    %1091 = vmatpush1.xpose.msra.mxu0 0.0
    %1092 = vmatprep.subr.mxu0 0.0
    %1093 = vmatpush1.xpose.msra.mxu0 0.0
    %1094 = vmatprep.subr.mxu0 0.0
    %1095 = vmatpush1.xpose.msra.mxu0 0.0
    %1096 = vmatprep.subr.mxu0 0.0
    %1097 = vmatpush1.xpose.msra.mxu0 0.0
    %1098 = vmatprep.subr.mxu0 0.0
    %1099 = vmatpush1.xpose.msra.mxu0 0.0
    %1100 = vmatprep.subr.mxu0 0.0
    %1101 = vmatpush1.xpose.msra.mxu0 0.0
    %1102 = vmatprep.subr.mxu0 0.0
    %1103 = vmatpush1.xpose.msra.mxu0 0.0
    %1104 = vmatprep.subr.mxu0 0.0
    %1105 = vmatpush1.xpose.msra.mxu0 0.0
    %1106 = vmatprep.subr.mxu0 0.0
    %1107 = vmatpush1.xpose.msra.mxu0 0.0
    %1108 = vmatprep.subr.mxu0 0.0
    %1109 = vmatpush1.xpose.msra.mxu0 0.0
    %1110 = vmatprep.subr.mxu0 0.0
    %1111 = vmatpush1.xpose.msra.mxu0 0.0
    %1112 = vmatprep.subr.mxu0 0.0
    %1113 = vmatpush1.xpose.msra.mxu0 0.0
    %1114 = vmatprep.subr.mxu0 0.0
    %1115 = vmatpush1.xpose.msra.mxu0 0.0
    %1116 = vmatprep.subr.mxu0 0.0
    %1117 = vmatpush1.xpose.msra.mxu0 0.0
    %1118 = vmatprep.subr.mxu0 0.0
    %1119 = vmatpush1.xpose.msra.mxu0 0.0
    %1120 = vmatprep.subr.mxu0 0.0
    %1121 = vmatpush1.xpose.msra.mxu0 0.0
    %1122 = vmatprep.subr.mxu0 0.0
    %1123 = vmatpush1.xpose.msra.mxu0 0.0
    %1124 = vmatprep.subr.mxu0 0.0
    %1125 = vmatpush1.xpose.msra.mxu0 0.0
    %1126 = vmatprep.subr.mxu0 0.0
    %1127 = vmatpush1.xpose.msra.mxu0 0.0
    %1128 = vmatprep.subr.mxu0 0.0
    %1129 = vmatpush1.xpose.msra.mxu0 0.0
    %1130 = vmatprep.subr.mxu0 0.0
    %1131 = vmatpush1.xpose.msra.mxu0 0.0
    %1132 = vmatprep.mubr.f32.mxu0 %v575
    %1133 = vmatmul.mubr.f32.gmra.mrb[0].mxu0 %v574
    %v1134 = vpop.f32.mrb[0].mxu0
    %v1135 = vadd.f32 0.0, %v1134
    %v1136 = vpop.f32.mrb[0].mxu0
    %1137 = vdwg.mxu0
    %v1138 = vadd.f32 %v996, %v1065
    %v1139 = vadd.f32 %v997, %v1135
    %vm1140 = vcmask 64512
    %v1141 = vsel %vm1140, %v1138, -inf
    %1142 = vmax.xlane.f32.xlu0 %v1141
    %v1143 = vpop.xlane.xlu0 %1142
    %v1144 = vsel %vm1140, %v1139, -inf
    %1145 = vmax.xlane.f32.xlu0 %v1144
    %v1146 = vpop.xlane.xlu0 %1145
    %v1147 = vsub.f32 %v1138, %v1143
    %v1148 = vsub.f32 %v1139, %v1146
    %v1149 = vmul.f32 %v1147, 1.442695
    %v1150 = vpow.pop %v1149
    %v1151 = vmul.f32 %v1148, 1.442695
    %v1152 = vpow.pop %v1151
    %v1153 = vsel %vm1140, %v1150, 0.0
    %1154 = vadd.xlane.f32.xlu0 %v1153
    %v1155 = vpop.xlane.xlu0 %1154
    %v1156 = vsel %vm1140, %v1152, 0.0
    %1157 = vadd.xlane.f32.xlu0 %v1156
    %v1158 = vpop.xlane.xlu0 %1157
    %v1159 = vrcp.pop %v1155
    %v1160 = vrcp.pop %v1158
    %v1161 = vmul.f32 %v1150, %v1159
    %v1162 = vmul.f32 %v1152, %v1160
    %v1164 = vsel %vm1140, %v1161, 0
    %1166 = vmatprep.subr.mxu0 %v111
    %1167 = vmatpush1.msra.mxu0 %v110
    %1168 = vmatprep.subr.mxu0 0.0
    %1169 = vmatpush1.msra.mxu0 0.0
    %1170 = vmatprep.subr.mxu0 0.0
    %1171 = vmatpush1.msra.mxu0 0.0
    %1172 = vmatprep.subr.mxu0 0.0
    %1173 = vmatpush1.msra.mxu0 0.0
    %1174 = vmatprep.subr.mxu0 0.0
    %1175 = vmatpush1.msra.mxu0 0.0
    %1176 = vmatprep.subr.mxu0 0.0
    %1177 = vmatpush1.msra.mxu0 0.0
    %1178 = vmatprep.subr.mxu0 0.0
    %1179 = vmatpush1.msra.mxu0 0.0
    %1180 = vmatprep.subr.mxu0 0.0
    %1181 = vmatpush1.msra.mxu0 0.0
    %1182 = vmatprep.subr.mxu0 0.0
    %1183 = vmatpush1.msra.mxu0 0.0
    %1184 = vmatprep.subr.mxu0 0.0
    %1185 = vmatpush1.msra.mxu0 0.0
    %1186 = vmatprep.subr.mxu0 0.0
    %1187 = vmatpush1.msra.mxu0 0.0
    %1188 = vmatprep.subr.mxu0 0.0
    %1189 = vmatpush1.msra.mxu0 0.0
    %1190 = vmatprep.subr.mxu0 0.0
    %1191 = vmatpush1.msra.mxu0 0.0
    %1192 = vmatprep.subr.mxu0 0.0
    %1193 = vmatpush1.msra.mxu0 0.0
    %1194 = vmatprep.subr.mxu0 0.0
    %1195 = vmatpush1.msra.mxu0 0.0
    %1196 = vmatprep.subr.mxu0 0.0
    %1197 = vmatpush1.msra.mxu0 0.0
    %1198 = vmatprep.subr.mxu0 0.0
    %1199 = vmatpush1.msra.mxu0 0.0
    %1200 = vmatprep.subr.mxu0 0.0
    %1201 = vmatpush1.msra.mxu0 0.0
    %1202 = vmatprep.subr.mxu0 0.0
    %1203 = vmatpush1.msra.mxu0 0.0
    %1204 = vmatprep.subr.mxu0 0.0
    %1205 = vmatpush1.msra.mxu0 0.0
    %1206 = vmatprep.subr.mxu0 0.0
    %1207 = vmatpush1.msra.mxu0 0.0
    %1208 = vmatprep.subr.mxu0 0.0
    %1209 = vmatpush1.msra.mxu0 0.0
    %1210 = vmatprep.subr.mxu0 0.0
    %1211 = vmatpush1.msra.mxu0 0.0
    %1212 = vmatprep.subr.mxu0 0.0
    %1213 = vmatpush1.msra.mxu0 0.0
    %1214 = vmatprep.subr.mxu0 0.0
    %1215 = vmatpush1.msra.mxu0 0.0
    %1216 = vmatprep.subr.mxu0 0.0
    %1217 = vmatpush1.msra.mxu0 0.0
    %1218 = vmatprep.subr.mxu0 0.0
    %1219 = vmatpush1.msra.mxu0 0.0
    %1220 = vmatprep.subr.mxu0 0.0
    %1221 = vmatpush1.msra.mxu0 0.0
    %1222 = vmatprep.subr.mxu0 0.0
    %1223 = vmatpush1.msra.mxu0 0.0
    %1224 = vmatprep.subr.mxu0 0.0
    %1225 = vmatpush1.msra.mxu0 0.0
    %1226 = vmatprep.subr.mxu0 0.0
    %1227 = vmatpush1.msra.mxu0 0.0
    %1228 = vmatprep.subr.mxu0 0.0
    %1229 = vmatpush1.msra.mxu0 0.0
    %1230 = vmatprep.mubr.f32.mxu0 0.0
    %1231 = vmatmul.mubr.f32.gmra.mrb[0].mxu0 %v1164
    %v1232 = vpop.f32.mrb[0].mxu0
    %v1233 = vadd.f32 0.0, %v1232
    %v1234 = vpop.f32.mrb[0].mxu0
    %v1235 = vadd.f32 0.0, %v1234
    %1236 = vdwg.mxu0
    %v1238 = vsel %vm1140, %v1162, 0
    %1240 = vmatprep.subr.mxu0 %v113
    %1241 = vmatpush1.msra.mxu0 %v112
    %1242 = vmatprep.subr.mxu0 0.0
    %1243 = vmatpush1.msra.mxu0 0.0
    %1244 = vmatprep.subr.mxu0 0.0
    %1245 = vmatpush1.msra.mxu0 0.0
    %1246 = vmatprep.subr.mxu0 0.0
    %1247 = vmatpush1.msra.mxu0 0.0
    %1248 = vmatprep.subr.mxu0 0.0
    %1249 = vmatpush1.msra.mxu0 0.0
    %1250 = vmatprep.subr.mxu0 0.0
    %1251 = vmatpush1.msra.mxu0 0.0
    %1252 = vmatprep.subr.mxu0 0.0
    %1253 = vmatpush1.msra.mxu0 0.0
    %1254 = vmatprep.subr.mxu0 0.0
    %1255 = vmatpush1.msra.mxu0 0.0
    %1256 = vmatprep.subr.mxu0 0.0
    %1257 = vmatpush1.msra.mxu0 0.0
    %1258 = vmatprep.subr.mxu0 0.0
    %1259 = vmatpush1.msra.mxu0 0.0
    %1260 = vmatprep.subr.mxu0 0.0
    %1261 = vmatpush1.msra.mxu0 0.0
    %1262 = vmatprep.subr.mxu0 0.0
    %1263 = vmatpush1.msra.mxu0 0.0
    %1264 = vmatprep.subr.mxu0 0.0
    %1265 = vmatpush1.msra.mxu0 0.0
    %1266 = vmatprep.subr.mxu0 0.0
    %1267 = vmatpush1.msra.mxu0 0.0
    %1268 = vmatprep.subr.mxu0 0.0
    %1269 = vmatpush1.msra.mxu0 0.0
    %1270 = vmatprep.subr.mxu0 0.0
    %1271 = vmatpush1.msra.mxu0 0.0
    %1272 = vmatprep.subr.mxu0 0.0
    %1273 = vmatpush1.msra.mxu0 0.0
    %1274 = vmatprep.subr.mxu0 0.0
    %1275 = vmatpush1.msra.mxu0 0.0
    %1276 = vmatprep.subr.mxu0 0.0
    %1277 = vmatpush1.msra.mxu0 0.0
    %1278 = vmatprep.subr.mxu0 0.0
    %1279 = vmatpush1.msra.mxu0 0.0
    %1280 = vmatprep.subr.mxu0 0.0
    %1281 = vmatpush1.msra.mxu0 0.0
    %1282 = vmatprep.subr.mxu0 0.0
    %1283 = vmatpush1.msra.mxu0 0.0
    %1284 = vmatprep.subr.mxu0 0.0
    %1285 = vmatpush1.msra.mxu0 0.0
    %1286 = vmatprep.subr.mxu0 0.0
    %1287 = vmatpush1.msra.mxu0 0.0
    %1288 = vmatprep.subr.mxu0 0.0
    %1289 = vmatpush1.msra.mxu0 0.0
    %1290 = vmatprep.subr.mxu0 0.0
    %1291 = vmatpush1.msra.mxu0 0.0
    %1292 = vmatprep.subr.mxu0 0.0
    %1293 = vmatpush1.msra.mxu0 0.0
    %1294 = vmatprep.subr.mxu0 0.0
    %1295 = vmatpush1.msra.mxu0 0.0
    %1296 = vmatprep.subr.mxu0 0.0
    %1297 = vmatpush1.msra.mxu0 0.0
    %1298 = vmatprep.subr.mxu0 0.0
    %1299 = vmatpush1.msra.mxu0 0.0
    %1300 = vmatprep.subr.mxu0 0.0
    %1301 = vmatpush1.msra.mxu0 0.0
    %1302 = vmatprep.subr.mxu0 0.0
    %1303 = vmatpush1.msra.mxu0 0.0
    %1304 = vmatprep.mubr.f32.mxu0 0.0
    %1305 = vmatmul.mubr.f32.gmra.mrb[0].mxu0 %v1238
    %v1306 = vpop.f32.mrb[0].mxu0
    %v1307 = vadd.f32 0.0, %v1306
    %v1308 = vpop.f32.mrb[0].mxu0
    %v1309 = vadd.f32 0.0, %v1308
    %1310 = vdwg.mxu0
    %1311 = vmatprep.subr.mxu0 %v153
    %1312 = vmatpush1.msra.mxu0 %v152
    %1313 = vmatprep.subr.mxu0 0.0
    %1314 = vmatpush1.msra.mxu0 0.0
    %1315 = vmatprep.subr.mxu0 0.0
    %1316 = vmatpush1.msra.mxu0 0.0
    %1317 = vmatprep.subr.mxu0 0.0
    %1318 = vmatpush1.msra.mxu0 0.0
    %1319 = vmatprep.subr.mxu0 0.0
    %1320 = vmatpush1.msra.mxu0 0.0
    %1321 = vmatprep.subr.mxu0 0.0
    %1322 = vmatpush1.msra.mxu0 0.0
    %1323 = vmatprep.subr.mxu0 0.0
    %1324 = vmatpush1.msra.mxu0 0.0
    %1325 = vmatprep.subr.mxu0 0.0
    %1326 = vmatpush1.msra.mxu0 0.0
    %1327 = vmatprep.subr.mxu0 0.0
    %1328 = vmatpush1.msra.mxu0 0.0
    %1329 = vmatprep.subr.mxu0 0.0
    %1330 = vmatpush1.msra.mxu0 0.0
    %1331 = vmatprep.subr.mxu0 0.0
    %1332 = vmatpush1.msra.mxu0 0.0
    %1333 = vmatprep.subr.mxu0 0.0
    %1334 = vmatpush1.msra.mxu0 0.0
    %1335 = vmatprep.subr.mxu0 0.0
    %1336 = vmatpush1.msra.mxu0 0.0
    %1337 = vmatprep.subr.mxu0 0.0
    %1338 = vmatpush1.msra.mxu0 0.0
    %1339 = vmatprep.subr.mxu0 0.0
    %1340 = vmatpush1.msra.mxu0 0.0
    %1341 = vmatprep.subr.mxu0 0.0
    %1342 = vmatpush1.msra.mxu0 0.0
    %1343 = vmatprep.subr.mxu0 0.0
    %1344 = vmatpush1.msra.mxu0 0.0
    %1345 = vmatprep.subr.mxu0 0.0
    %1346 = vmatpush1.msra.mxu0 0.0
    %1347 = vmatprep.subr.mxu0 0.0
    %1348 = vmatpush1.msra.mxu0 0.0
    %1349 = vmatprep.subr.mxu0 0.0
    %1350 = vmatpush1.msra.mxu0 0.0
    %1351 = vmatprep.subr.mxu0 0.0
    %1352 = vmatpush1.msra.mxu0 0.0
    %1353 = vmatprep.subr.mxu0 0.0
    %1354 = vmatpush1.msra.mxu0 0.0
    %1355 = vmatprep.subr.mxu0 0.0
    %1356 = vmatpush1.msra.mxu0 0.0
    %1357 = vmatprep.subr.mxu0 0.0
    %1358 = vmatpush1.msra.mxu0 0.0
    %1359 = vmatprep.subr.mxu0 0.0
    %1360 = vmatpush1.msra.mxu0 0.0
    %1361 = vmatprep.subr.mxu0 0.0
    %1362 = vmatpush1.msra.mxu0 0.0
    %1363 = vmatprep.subr.mxu0 0.0
    %1364 = vmatpush1.msra.mxu0 0.0
    %1365 = vmatprep.subr.mxu0 0.0
    %1366 = vmatpush1.msra.mxu0 0.0
    %1367 = vmatprep.subr.mxu0 0.0
    %1368 = vmatpush1.msra.mxu0 0.0
    %1369 = vmatprep.subr.mxu0 0.0
    %1370 = vmatpush1.msra.mxu0 0.0
    %1371 = vmatprep.subr.mxu0 0.0
    %1372 = vmatpush1.msra.mxu0 0.0
    %1373 = vmatprep.subr.mxu0 0.0
    %1374 = vmatpush1.msra.mxu0 0.0
    %1375 = vmatprep.mubr.f32.mxu0 0.0
    %1376 = vmatmul.mubr.f32.gmra.mrb[0].mxu0 %v1164
    %v1377 = vpop.f32.mrb[0].mxu0
    %v1378 = vadd.f32 0.0, %v1377
    %v1379 = vpop.f32.mrb[0].mxu0
    %v1380 = vadd.f32 0.0, %v1379
    %1381 = vdwg.mxu0
    %1382 = vmatprep.subr.mxu0 %v155
    %1383 = vmatpush1.msra.mxu0 %v154
    %1384 = vmatprep.subr.mxu0 0.0
    %1385 = vmatpush1.msra.mxu0 0.0
    %1386 = vmatprep.subr.mxu0 0.0
    %1387 = vmatpush1.msra.mxu0 0.0
    %1388 = vmatprep.subr.mxu0 0.0
    %1389 = vmatpush1.msra.mxu0 0.0
    %1390 = vmatprep.subr.mxu0 0.0
    %1391 = vmatpush1.msra.mxu0 0.0
    %1392 = vmatprep.subr.mxu0 0.0
    %1393 = vmatpush1.msra.mxu0 0.0
    %1394 = vmatprep.subr.mxu0 0.0
    %1395 = vmatpush1.msra.mxu0 0.0
    %1396 = vmatprep.subr.mxu0 0.0
    %1397 = vmatpush1.msra.mxu0 0.0
    %1398 = vmatprep.subr.mxu0 0.0
    %1399 = vmatpush1.msra.mxu0 0.0
    %1400 = vmatprep.subr.mxu0 0.0
    %1401 = vmatpush1.msra.mxu0 0.0
    %1402 = vmatprep.subr.mxu0 0.0
    %1403 = vmatpush1.msra.mxu0 0.0
    %1404 = vmatprep.subr.mxu0 0.0
    %1405 = vmatpush1.msra.mxu0 0.0
    %1406 = vmatprep.subr.mxu0 0.0
    %1407 = vmatpush1.msra.mxu0 0.0
    %1408 = vmatprep.subr.mxu0 0.0
    %1409 = vmatpush1.msra.mxu0 0.0
    %1410 = vmatprep.subr.mxu0 0.0
    %1411 = vmatpush1.msra.mxu0 0.0
    %1412 = vmatprep.subr.mxu0 0.0
    %1413 = vmatpush1.msra.mxu0 0.0
    %1414 = vmatprep.subr.mxu0 0.0
    %1415 = vmatpush1.msra.mxu0 0.0
    %1416 = vmatprep.subr.mxu0 0.0
    %1417 = vmatpush1.msra.mxu0 0.0
    %1418 = vmatprep.subr.mxu0 0.0
    %1419 = vmatpush1.msra.mxu0 0.0
    %1420 = vmatprep.subr.mxu0 0.0
    %1421 = vmatpush1.msra.mxu0 0.0
    %1422 = vmatprep.subr.mxu0 0.0
    %1423 = vmatpush1.msra.mxu0 0.0
    %1424 = vmatprep.subr.mxu0 0.0
    %1425 = vmatpush1.msra.mxu0 0.0
    %1426 = vmatprep.subr.mxu0 0.0
    %1427 = vmatpush1.msra.mxu0 0.0
    %1428 = vmatprep.subr.mxu0 0.0
    %1429 = vmatpush1.msra.mxu0 0.0
    %1430 = vmatprep.subr.mxu0 0.0
    %1431 = vmatpush1.msra.mxu0 0.0
    %1432 = vmatprep.subr.mxu0 0.0
    %1433 = vmatpush1.msra.mxu0 0.0
    %1434 = vmatprep.subr.mxu0 0.0
    %1435 = vmatpush1.msra.mxu0 0.0
    %1436 = vmatprep.subr.mxu0 0.0
    %1437 = vmatpush1.msra.mxu0 0.0
    %1438 = vmatprep.subr.mxu0 0.0
    %1439 = vmatpush1.msra.mxu0 0.0
    %1440 = vmatprep.subr.mxu0 0.0
    %1441 = vmatpush1.msra.mxu0 0.0
    %1442 = vmatprep.subr.mxu0 0.0
    %1443 = vmatpush1.msra.mxu0 0.0
    %1444 = vmatprep.subr.mxu0 0.0
    %1445 = vmatpush1.msra.mxu0 0.0
    %1446 = vmatprep.mubr.f32.mxu0 0.0
    %1447 = vmatmul.mubr.f32.gmra.mrb[0].mxu0 %v1238
    %v1448 = vpop.f32.mrb[0].mxu0
    %v1449 = vadd.f32 0.0, %v1448
    %v1450 = vpop.f32.mrb[0].mxu0
    %v1451 = vadd.f32 0.0, %v1450
    %1452 = vdwg.mxu0
    %1453 = vmatprep.subr.mxu0 %v195
    %1454 = vmatpush1.msra.mxu0 %v194
    %1455 = vmatprep.subr.mxu0 0.0
    %1456 = vmatpush1.msra.mxu0 0.0
    %1457 = vmatprep.subr.mxu0 0.0
    %1458 = vmatpush1.msra.mxu0 0.0
    %1459 = vmatprep.subr.mxu0 0.0
    %1460 = vmatpush1.msra.mxu0 0.0
    %1461 = vmatprep.subr.mxu0 0.0
    %1462 = vmatpush1.msra.mxu0 0.0
    %1463 = vmatprep.subr.mxu0 0.0
    %1464 = vmatpush1.msra.mxu0 0.0
    %1465 = vmatprep.subr.mxu0 0.0
    %1466 = vmatpush1.msra.mxu0 0.0
    %1467 = vmatprep.subr.mxu0 0.0
    %1468 = vmatpush1.msra.mxu0 0.0
    %1469 = vmatprep.subr.mxu0 0.0
    %1470 = vmatpush1.msra.mxu0 0.0
    %1471 = vmatprep.subr.mxu0 0.0
    %1472 = vmatpush1.msra.mxu0 0.0
    %1473 = vmatprep.subr.mxu0 0.0
    %1474 = vmatpush1.msra.mxu0 0.0
    %1475 = vmatprep.subr.mxu0 0.0
    %1476 = vmatpush1.msra.mxu0 0.0
    %1477 = vmatprep.subr.mxu0 0.0
    %1478 = vmatpush1.msra.mxu0 0.0
    %1479 = vmatprep.subr.mxu0 0.0
    %1480 = vmatpush1.msra.mxu0 0.0
    %1481 = vmatprep.subr.mxu0 0.0
    %1482 = vmatpush1.msra.mxu0 0.0
    %1483 = vmatprep.subr.mxu0 0.0
    %1484 = vmatpush1.msra.mxu0 0.0
    %1485 = vmatprep.subr.mxu0 0.0
    %1486 = vmatpush1.msra.mxu0 0.0
    %1487 = vmatprep.subr.mxu0 0.0
    %1488 = vmatpush1.msra.mxu0 0.0
    %1489 = vmatprep.subr.mxu0 0.0
    %1490 = vmatpush1.msra.mxu0 0.0
    %1491 = vmatprep.subr.mxu0 0.0
    %1492 = vmatpush1.msra.mxu0 0.0
    %1493 = vmatprep.subr.mxu0 0.0
    %1494 = vmatpush1.msra.mxu0 0.0
    %1495 = vmatprep.subr.mxu0 0.0
    %1496 = vmatpush1.msra.mxu0 0.0
    %1497 = vmatprep.subr.mxu0 0.0
    %1498 = vmatpush1.msra.mxu0 0.0
    %1499 = vmatprep.subr.mxu0 0.0
    %1500 = vmatpush1.msra.mxu0 0.0
    %1501 = vmatprep.subr.mxu0 0.0
    %1502 = vmatpush1.msra.mxu0 0.0
    %1503 = vmatprep.subr.mxu0 0.0
    %1504 = vmatpush1.msra.mxu0 0.0
    %1505 = vmatprep.subr.mxu0 0.0
    %1506 = vmatpush1.msra.mxu0 0.0
    %1507 = vmatprep.subr.mxu0 0.0
    %1508 = vmatpush1.msra.mxu0 0.0
    %1509 = vmatprep.subr.mxu0 0.0
    %1510 = vmatpush1.msra.mxu0 0.0
    %1511 = vmatprep.subr.mxu0 0.0
    %1512 = vmatpush1.msra.mxu0 0.0
    %1513 = vmatprep.subr.mxu0 0.0
    %1514 = vmatpush1.msra.mxu0 0.0
    %1515 = vmatprep.subr.mxu0 0.0
    %1516 = vmatpush1.msra.mxu0 0.0
    %1517 = vmatprep.mubr.f32.mxu0 0.0
    %1518 = vmatmul.mubr.f32.gmra.mrb[0].mxu0 %v1164
    %v1519 = vpop.f32.mrb[0].mxu0
    %v1520 = vadd.f32 0.0, %v1519
    %v1521 = vpop.f32.mrb[0].mxu0
    %v1522 = vadd.f32 0.0, %v1521
    %1523 = vdwg.mxu0
    %1524 = vmatprep.subr.mxu0 %v197
    %1525 = vmatpush1.msra.mxu0 %v196
    %1526 = vmatprep.subr.mxu0 0.0
    %1527 = vmatpush1.msra.mxu0 0.0
    %1528 = vmatprep.subr.mxu0 0.0
    %1529 = vmatpush1.msra.mxu0 0.0
    %1530 = vmatprep.subr.mxu0 0.0
    %1531 = vmatpush1.msra.mxu0 0.0
    %1532 = vmatprep.subr.mxu0 0.0
    %1533 = vmatpush1.msra.mxu0 0.0
    %1534 = vmatprep.subr.mxu0 0.0
    %1535 = vmatpush1.msra.mxu0 0.0
    %1536 = vmatprep.subr.mxu0 0.0
    %1537 = vmatpush1.msra.mxu0 0.0
    %1538 = vmatprep.subr.mxu0 0.0
    %1539 = vmatpush1.msra.mxu0 0.0
    %1540 = vmatprep.subr.mxu0 0.0
    %1541 = vmatpush1.msra.mxu0 0.0
    %1542 = vmatprep.subr.mxu0 0.0
    %1543 = vmatpush1.msra.mxu0 0.0
    %1544 = vmatprep.subr.mxu0 0.0
    %1545 = vmatpush1.msra.mxu0 0.0
    %1546 = vmatprep.subr.mxu0 0.0
    %1547 = vmatpush1.msra.mxu0 0.0
    %1548 = vmatprep.subr.mxu0 0.0
    %1549 = vmatpush1.msra.mxu0 0.0
    %1550 = vmatprep.subr.mxu0 0.0
    %1551 = vmatpush1.msra.mxu0 0.0
    %1552 = vmatprep.subr.mxu0 0.0
    %1553 = vmatpush1.msra.mxu0 0.0
    %1554 = vmatprep.subr.mxu0 0.0
    %1555 = vmatpush1.msra.mxu0 0.0
    %1556 = vmatprep.subr.mxu0 0.0
    %1557 = vmatpush1.msra.mxu0 0.0
    %1558 = vmatprep.subr.mxu0 0.0
    %1559 = vmatpush1.msra.mxu0 0.0
    %1560 = vmatprep.subr.mxu0 0.0
    %1561 = vmatpush1.msra.mxu0 0.0
    %1562 = vmatprep.subr.mxu0 0.0
    %1563 = vmatpush1.msra.mxu0 0.0
    %1564 = vmatprep.subr.mxu0 0.0
    %1565 = vmatpush1.msra.mxu0 0.0
    %1566 = vmatprep.subr.mxu0 0.0
    %1567 = vmatpush1.msra.mxu0 0.0
    %1568 = vmatprep.subr.mxu0 0.0
    %1569 = vmatpush1.msra.mxu0 0.0
    %1570 = vmatprep.subr.mxu0 0.0
    %1571 = vmatpush1.msra.mxu0 0.0
    %1572 = vmatprep.subr.mxu0 0.0
    %1573 = vmatpush1.msra.mxu0 0.0
    %1574 = vmatprep.subr.mxu0 0.0
    %1575 = vmatpush1.msra.mxu0 0.0
    %1576 = vmatprep.subr.mxu0 0.0
    %1577 = vmatpush1.msra.mxu0 0.0
    %1578 = vmatprep.subr.mxu0 0.0
    %1579 = vmatpush1.msra.mxu0 0.0
    %1580 = vmatprep.subr.mxu0 0.0
    %1581 = vmatpush1.msra.mxu0 0.0
    %1582 = vmatprep.subr.mxu0 0.0
    %1583 = vmatpush1.msra.mxu0 0.0
    %1584 = vmatprep.subr.mxu0 0.0
    %1585 = vmatpush1.msra.mxu0 0.0
    %1586 = vmatprep.subr.mxu0 0.0
    %1587 = vmatpush1.msra.mxu0 0.0
    %1588 = vmatprep.mubr.f32.mxu0 0.0
    %1589 = vmatmul.mubr.f32.gmra.mrb[0].mxu0 %v1238
    %v1590 = vpop.f32.mrb[0].mxu0
    %v1591 = vadd.f32 0.0, %v1590
    %v1592 = vpop.f32.mrb[0].mxu0
    %v1593 = vadd.f32 0.0, %v1592
    %1594 = vdwg.mxu0
    %1595 = vmatprep.subr.mxu0 %v237
    %1596 = vmatpush1.msra.mxu0 %v236
    %1597 = vmatprep.subr.mxu0 0.0
    %1598 = vmatpush1.msra.mxu0 0.0
    %1599 = vmatprep.subr.mxu0 0.0
    %1600 = vmatpush1.msra.mxu0 0.0
    %1601 = vmatprep.subr.mxu0 0.0
    %1602 = vmatpush1.msra.mxu0 0.0
    %1603 = vmatprep.subr.mxu0 0.0
    %1604 = vmatpush1.msra.mxu0 0.0
    %1605 = vmatprep.subr.mxu0 0.0
    %1606 = vmatpush1.msra.mxu0 0.0
    %1607 = vmatprep.subr.mxu0 0.0
    %1608 = vmatpush1.msra.mxu0 0.0
    %1609 = vmatprep.subr.mxu0 0.0
    %1610 = vmatpush1.msra.mxu0 0.0
    %1611 = vmatprep.subr.mxu0 0.0
    %1612 = vmatpush1.msra.mxu0 0.0
    %1613 = vmatprep.subr.mxu0 0.0
    %1614 = vmatpush1.msra.mxu0 0.0
    %1615 = vmatprep.subr.mxu0 0.0
    %1616 = vmatpush1.msra.mxu0 0.0
    %1617 = vmatprep.subr.mxu0 0.0
    %1618 = vmatpush1.msra.mxu0 0.0
    %1619 = vmatprep.subr.mxu0 0.0
    %1620 = vmatpush1.msra.mxu0 0.0
    %1621 = vmatprep.subr.mxu0 0.0
    %1622 = vmatpush1.msra.mxu0 0.0
    %1623 = vmatprep.subr.mxu0 0.0
    %1624 = vmatpush1.msra.mxu0 0.0
    %1625 = vmatprep.subr.mxu0 0.0
    %1626 = vmatpush1.msra.mxu0 0.0
    %1627 = vmatprep.subr.mxu0 0.0
    %1628 = vmatpush1.msra.mxu0 0.0
    %1629 = vmatprep.subr.mxu0 0.0
    %1630 = vmatpush1.msra.mxu0 0.0
    %1631 = vmatprep.subr.mxu0 0.0
    %1632 = vmatpush1.msra.mxu0 0.0
    %1633 = vmatprep.subr.mxu0 0.0
    %1634 = vmatpush1.msra.mxu0 0.0
    %1635 = vmatprep.subr.mxu0 0.0
    %1636 = vmatpush1.msra.mxu0 0.0
    %1637 = vmatprep.subr.mxu0 0.0
    %1638 = vmatpush1.msra.mxu0 0.0
    %1639 = vmatprep.subr.mxu0 0.0
    %1640 = vmatpush1.msra.mxu0 0.0
    %1641 = vmatprep.subr.mxu0 0.0
    %1642 = vmatpush1.msra.mxu0 0.0
    %1643 = vmatprep.subr.mxu0 0.0
    %1644 = vmatpush1.msra.mxu0 0.0
    %1645 = vmatprep.subr.mxu0 0.0
    %1646 = vmatpush1.msra.mxu0 0.0
    %1647 = vmatprep.subr.mxu0 0.0
    %1648 = vmatpush1.msra.mxu0 0.0
    %1649 = vmatprep.subr.mxu0 0.0
    %1650 = vmatpush1.msra.mxu0 0.0
    %1651 = vmatprep.subr.mxu0 0.0
    %1652 = vmatpush1.msra.mxu0 0.0
    %1653 = vmatprep.subr.mxu0 0.0
    %1654 = vmatpush1.msra.mxu0 0.0
    %1655 = vmatprep.subr.mxu0 0.0
    %1656 = vmatpush1.msra.mxu0 0.0
    %1657 = vmatprep.subr.mxu0 0.0
    %1658 = vmatpush1.msra.mxu0 0.0
    %1659 = vmatprep.mubr.f32.mxu0 0.0
    %1660 = vmatmul.mubr.f32.gmra.mrb[0].mxu0 %v1164
    %v1661 = vpop.f32.mrb[0].mxu0
    %v1662 = vadd.f32 0.0, %v1661
    %v1663 = vpop.f32.mrb[0].mxu0
    %v1664 = vadd.f32 0.0, %v1663
    %1665 = vdwg.mxu0
    %1666 = vmatprep.subr.mxu0 %v239
    %1667 = vmatpush1.msra.mxu0 %v238
    %1668 = vmatprep.subr.mxu0 0.0
    %1669 = vmatpush1.msra.mxu0 0.0
    %1670 = vmatprep.subr.mxu0 0.0
    %1671 = vmatpush1.msra.mxu0 0.0
    %1672 = vmatprep.subr.mxu0 0.0
    %1673 = vmatpush1.msra.mxu0 0.0
    %1674 = vmatprep.subr.mxu0 0.0
    %1675 = vmatpush1.msra.mxu0 0.0
    %1676 = vmatprep.subr.mxu0 0.0
    %1677 = vmatpush1.msra.mxu0 0.0
    %1678 = vmatprep.subr.mxu0 0.0
    %1679 = vmatpush1.msra.mxu0 0.0
    %1680 = vmatprep.subr.mxu0 0.0
    %1681 = vmatpush1.msra.mxu0 0.0
    %1682 = vmatprep.subr.mxu0 0.0
    %1683 = vmatpush1.msra.mxu0 0.0
    %1684 = vmatprep.subr.mxu0 0.0
    %1685 = vmatpush1.msra.mxu0 0.0
    %1686 = vmatprep.subr.mxu0 0.0
    %1687 = vmatpush1.msra.mxu0 0.0
    %1688 = vmatprep.subr.mxu0 0.0
    %1689 = vmatpush1.msra.mxu0 0.0
    %1690 = vmatprep.subr.mxu0 0.0
    %1691 = vmatpush1.msra.mxu0 0.0
    %1692 = vmatprep.subr.mxu0 0.0
    %1693 = vmatpush1.msra.mxu0 0.0
    %1694 = vmatprep.subr.mxu0 0.0
    %1695 = vmatpush1.msra.mxu0 0.0
    %1696 = vmatprep.subr.mxu0 0.0
    %1697 = vmatpush1.msra.mxu0 0.0
    %1698 = vmatprep.subr.mxu0 0.0
    %1699 = vmatpush1.msra.mxu0 0.0
    %1700 = vmatprep.subr.mxu0 0.0
    %1701 = vmatpush1.msra.mxu0 0.0
    %1702 = vmatprep.subr.mxu0 0.0
    %1703 = vmatpush1.msra.mxu0 0.0
    %1704 = vmatprep.subr.mxu0 0.0
    %1705 = vmatpush1.msra.mxu0 0.0
    %1706 = vmatprep.subr.mxu0 0.0
    %1707 = vmatpush1.msra.mxu0 0.0
    %1708 = vmatprep.subr.mxu0 0.0
    %1709 = vmatpush1.msra.mxu0 0.0
    %1710 = vmatprep.subr.mxu0 0.0
    %1711 = vmatpush1.msra.mxu0 0.0
    %1712 = vmatprep.subr.mxu0 0.0
    %1713 = vmatpush1.msra.mxu0 0.0
    %1714 = vmatprep.subr.mxu0 0.0
    %1715 = vmatpush1.msra.mxu0 0.0
    %1716 = vmatprep.subr.mxu0 0.0
    %1717 = vmatpush1.msra.mxu0 0.0
    %1718 = vmatprep.subr.mxu0 0.0
    %1719 = vmatpush1.msra.mxu0 0.0
    %1720 = vmatprep.subr.mxu0 0.0
    %1721 = vmatpush1.msra.mxu0 0.0
    %1722 = vmatprep.subr.mxu0 0.0
    %1723 = vmatpush1.msra.mxu0 0.0
    %1724 = vmatprep.subr.mxu0 0.0
    %1725 = vmatpush1.msra.mxu0 0.0
    %1726 = vmatprep.subr.mxu0 0.0
    %1727 = vmatpush1.msra.mxu0 0.0
    %1728 = vmatprep.subr.mxu0 0.0
    %1729 = vmatpush1.msra.mxu0 0.0
    %1730 = vmatprep.mubr.f32.mxu0 0.0
    %1731 = vmatmul.mubr.f32.gmra.mrb[0].mxu0 %v1238
    %v1732 = vpop.f32.mrb[0].mxu0
    %v1733 = vadd.f32 0.0, %v1732
    %v1734 = vpop.f32.mrb[0].mxu0
    %v1735 = vadd.f32 0.0, %v1734
    %1736 = vdwg.mxu0
    %s1737 = sld [smem:[#allocation2 + $0x600]]
    %v1738 = vstv %s1737
    %v1739 = vmul.f32 %v1233, %v1738
    %v1740 = vmul.f32 %v1235, %v1738
    %v1741 = vmul.f32 %v1307, %v1738
    %v1742 = vmul.f32 %v1309, %v1738
    %s1743 = sld [smem:[#allocation2 + $0x601]]
    %v1744 = vstv %s1743
    %v1745 = vmul.f32 %v1378, %v1744
    %v1746 = vmul.f32 %v1380, %v1744
    %v1747 = vmul.f32 %v1449, %v1744
    %v1748 = vmul.f32 %v1451, %v1744
    %v1749 = vadd.f32 %v1739, %v1745
    %v1750 = vadd.f32 %v1740, %v1746
    %v1751 = vadd.f32 %v1741, %v1747
    %v1752 = vadd.f32 %v1742, %v1748
    %s1753 = sld [smem:[#allocation2 + $0x602]]
    %v1754 = vstv %s1753
    %v1755 = vmul.f32 %v1520, %v1754
    %v1756 = vmul.f32 %v1522, %v1754
    %v1757 = vmul.f32 %v1591, %v1754
    %v1758 = vmul.f32 %v1593, %v1754
    %v1759 = vadd.f32 %v1749, %v1755
    %v1760 = vadd.f32 %v1750, %v1756
    %v1761 = vadd.f32 %v1751, %v1757
    %v1762 = vadd.f32 %v1752, %v1758
    %s1763 = sld [smem:[#allocation2 + $0x603]]
    %v1764 = vstv %s1763
    %v1765 = vmul.f32 %v1662, %v1764
    %v1766 = vmul.f32 %v1664, %v1764
    %v1767 = vmul.f32 %v1733, %v1764
    %v1768 = vmul.f32 %v1735, %v1764
    %v1769 = vadd.f32 %v1759, %v1765
    %v1770 = vadd.f32 %v1760, %v1766
    %v1771 = vadd.f32 %v1761, %v1767
    %v1772 = vadd.f32 %v1762, %v1768
    %s1773 = sld [smem:[#allocation6 + $0x180]]
    %v1774 = vstv %s1773
    %v1775 = vadd.f32 %v1769, %v1774
    %v1776 = vadd.f32 %v1770, %v1774
    %v1777 = vadd.f32 %v1771, %v1774
    %v1778 = vadd.f32 %v1772, %v1774
    %v1779 = vadd.f32 %v1775, %v56
    %v1780 = vadd.f32 %v1776, %v57
    %v1781 = vadd.f32 %v1777, %v64
    %v1782 = vadd.f32 %v1778, %v65
    %v1783 = vmax.f32 %v1779, 0.0
    %v1784 = vmax.f32 %v1780, 0.0
    %v1785 = vmax.f32 %v1781, 0.0
    %v1786 = vmax.f32 %v1782, 0.0
    %1787 = vst [vmem:[#allocation9] sm:$0xff] %v1783
    %1788 = vst [vmem:[#allocation9 + $0x8] sm:$0xff] %v1784
    %1789 = vst [vmem:[#allocation9 + $0x40] sm:$0xff] %v1785
    %1790 = vst [vmem:[#allocation9 + $0x48] sm:$0xff] %v1786
    %s1791 = sld [smem:[#allocation2 + $0x680]]
    %v1792 = vstv %s1791
    %v1793 = vmul.f32 %v1233, %v1792
    %v1794 = vmul.f32 %v1235, %v1792
    %v1795 = vmul.f32 %v1307, %v1792
    %v1796 = vmul.f32 %v1309, %v1792
    %s1797 = sld [smem:[#allocation2 + $0x681]]
    %v1798 = vstv %s1797
    %v1799 = vmul.f32 %v1378, %v1798
    %v1800 = vmul.f32 %v1380, %v1798
    %v1801 = vmul.f32 %v1449, %v1798
    %v1802 = vmul.f32 %v1451, %v1798
    %v1803 = vadd.f32 %v1793, %v1799
    %v1804 = vadd.f32 %v1794, %v1800
    %v1805 = vadd.f32 %v1795, %v1801
    %v1806 = vadd.f32 %v1796, %v1802
    %s1807 = sld [smem:[#allocation2 + $0x682]]
    %v1808 = vstv %s1807
    %v1809 = vmul.f32 %v1520, %v1808
    %v1810 = vmul.f32 %v1522, %v1808
    %v1811 = vmul.f32 %v1591, %v1808
    %v1812 = vmul.f32 %v1593, %v1808
    %v1813 = vadd.f32 %v1803, %v1809
    %v1814 = vadd.f32 %v1804, %v1810
    %v1815 = vadd.f32 %v1805, %v1811
    %v1816 = vadd.f32 %v1806, %v1812
    %s1817 = sld [smem:[#allocation2 + $0x683]]
    %v1818 = vstv %s1817
    %v1819 = vmul.f32 %v1662, %v1818
    %v1820 = vmul.f32 %v1664, %v1818
    %v1821 = vmul.f32 %v1733, %v1818
    %v1822 = vmul.f32 %v1735, %v1818
    %v1823 = vadd.f32 %v1813, %v1819
    %v1824 = vadd.f32 %v1814, %v1820
    %v1825 = vadd.f32 %v1815, %v1821
    %v1826 = vadd.f32 %v1816, %v1822
    %s1827 = sld [smem:[#allocation6 + $0x181]]
    %v1828 = vstv %s1827
    %v1829 = vadd.f32 %v1823, %v1828
    %v1830 = vadd.f32 %v1824, %v1828
    %v1831 = vadd.f32 %v1825, %v1828
    %v1832 = vadd.f32 %v1826, %v1828
    %v1833 = vadd.f32 %v1829, %v58
    %v1834 = vadd.f32 %v1830, %v59
    %v1835 = vadd.f32 %v1831, %v66
    %v1836 = vadd.f32 %v1832, %v67
    %v1837 = vmax.f32 %v1833, 0.0
    %v1838 = vmax.f32 %v1834, 0.0
    %v1839 = vmax.f32 %v1835, 0.0
    %v1840 = vmax.f32 %v1836, 0.0
    %1841 = vst [vmem:[#allocation9 + $0x10] sm:$0xff] %v1837
    %1842 = vst [vmem:[#allocation9 + $0x18] sm:$0xff] %v1838
    %1843 = vst [vmem:[#allocation9 + $0x50] sm:$0xff] %v1839
    %1844 = vst [vmem:[#allocation9 + $0x58] sm:$0xff] %v1840
    %s1845 = sld [smem:[#allocation2 + $0x700]]
    %v1846 = vstv %s1845
    %v1847 = vmul.f32 %v1233, %v1846
    %v1848 = vmul.f32 %v1235, %v1846
    %v1849 = vmul.f32 %v1307, %v1846
    %v1850 = vmul.f32 %v1309, %v1846
    %s1851 = sld [smem:[#allocation2 + $0x701]]
    %v1852 = vstv %s1851
    %v1853 = vmul.f32 %v1378, %v1852
    %v1854 = vmul.f32 %v1380, %v1852
    %v1855 = vmul.f32 %v1449, %v1852
    %v1856 = vmul.f32 %v1451, %v1852
    %v1857 = vadd.f32 %v1847, %v1853
    %v1858 = vadd.f32 %v1848, %v1854
    %v1859 = vadd.f32 %v1849, %v1855
    %v1860 = vadd.f32 %v1850, %v1856
    %s1861 = sld [smem:[#allocation2 + $0x702]]
    %v1862 = vstv %s1861
    %v1863 = vmul.f32 %v1520, %v1862
    %v1864 = vmul.f32 %v1522, %v1862
    %v1865 = vmul.f32 %v1591, %v1862
    %v1866 = vmul.f32 %v1593, %v1862
    %v1867 = vadd.f32 %v1857, %v1863
    %v1868 = vadd.f32 %v1858, %v1864
    %v1869 = vadd.f32 %v1859, %v1865
    %v1870 = vadd.f32 %v1860, %v1866
    %s1871 = sld [smem:[#allocation2 + $0x703]]
    %v1872 = vstv %s1871
    %v1873 = vmul.f32 %v1662, %v1872
    %v1874 = vmul.f32 %v1664, %v1872
    %v1875 = vmul.f32 %v1733, %v1872
    %v1876 = vmul.f32 %v1735, %v1872
    %v1877 = vadd.f32 %v1867, %v1873
    %v1878 = vadd.f32 %v1868, %v1874
    %v1879 = vadd.f32 %v1869, %v1875
    %v1880 = vadd.f32 %v1870, %v1876
    %s1881 = sld [smem:[#allocation6 + $0x182]]
    %v1882 = vstv %s1881
    %v1883 = vadd.f32 %v1877, %v1882
    %v1884 = vadd.f32 %v1878, %v1882
    %v1885 = vadd.f32 %v1879, %v1882
    %v1886 = vadd.f32 %v1880, %v1882
    %v1887 = vadd.f32 %v1883, %v60
    %v1888 = vadd.f32 %v1884, %v61
    %v1889 = vadd.f32 %v1885, %v68
    %v1890 = vadd.f32 %v1886, %v69
    %v1891 = vmax.f32 %v1887, 0.0
    %v1892 = vmax.f32 %v1888, 0.0
    %v1893 = vmax.f32 %v1889, 0.0
    %v1894 = vmax.f32 %v1890, 0.0
    %1895 = vst [vmem:[#allocation9 + $0x20] sm:$0xff] %v1891
    %1896 = vst [vmem:[#allocation9 + $0x28] sm:$0xff] %v1892
    %1897 = vst [vmem:[#allocation9 + $0x60] sm:$0xff] %v1893
    %1898 = vst [vmem:[#allocation9 + $0x68] sm:$0xff] %v1894
    %s1899 = sld [smem:[#allocation2 + $0x780]]
    %v1900 = vstv %s1899
    %v1901 = vmul.f32 %v1233, %v1900
    %v1902 = vmul.f32 %v1235, %v1900
    %v1903 = vmul.f32 %v1307, %v1900
    %v1904 = vmul.f32 %v1309, %v1900
    %s1905 = sld [smem:[#allocation2 + $0x781]]
    %v1906 = vstv %s1905
    %v1907 = vmul.f32 %v1378, %v1906
    %v1908 = vmul.f32 %v1380, %v1906
    %v1909 = vmul.f32 %v1449, %v1906
    %v1910 = vmul.f32 %v1451, %v1906
    %v1911 = vadd.f32 %v1901, %v1907
    %v1912 = vadd.f32 %v1902, %v1908
    %v1913 = vadd.f32 %v1903, %v1909
    %v1914 = vadd.f32 %v1904, %v1910
    %s1915 = sld [smem:[#allocation2 + $0x782]]
    %v1916 = vstv %s1915
    %v1917 = vmul.f32 %v1520, %v1916
    %v1918 = vmul.f32 %v1522, %v1916
    %v1919 = vmul.f32 %v1591, %v1916
    %v1920 = vmul.f32 %v1593, %v1916
    %v1921 = vadd.f32 %v1911, %v1917
    %v1922 = vadd.f32 %v1912, %v1918
    %v1923 = vadd.f32 %v1913, %v1919
    %v1924 = vadd.f32 %v1914, %v1920
    %s1925 = sld [smem:[#allocation2 + $0x783]]
    %v1926 = vstv %s1925
    %v1927 = vmul.f32 %v1662, %v1926
    %v1928 = vmul.f32 %v1664, %v1926
    %v1929 = vmul.f32 %v1733, %v1926
    %v1930 = vmul.f32 %v1735, %v1926
    %v1931 = vadd.f32 %v1921, %v1927
    %v1932 = vadd.f32 %v1922, %v1928
    %v1933 = vadd.f32 %v1923, %v1929
    %v1934 = vadd.f32 %v1924, %v1930
    %s1935 = sld [smem:[#allocation6 + $0x183]]
    %v1936 = vstv %s1935
    %v1937 = vadd.f32 %v1931, %v1936
    %v1938 = vadd.f32 %v1932, %v1936
    %v1939 = vadd.f32 %v1933, %v1936
    %v1940 = vadd.f32 %v1934, %v1936
    %v1941 = vadd.f32 %v1937, %v62
    %v1942 = vadd.f32 %v1938, %v63
    %v1943 = vadd.f32 %v1939, %v70
    %v1944 = vadd.f32 %v1940, %v71
    %v1945 = vmax.f32 %v1941, 0.0
    %v1946 = vmax.f32 %v1942, 0.0
    %v1947 = vmax.f32 %v1943, 0.0
    %v1948 = vmax.f32 %v1944, 0.0
    %1949 = vst [vmem:[#allocation9 + $0x30] sm:$0xff] %v1945
    %1950 = vst [vmem:[#allocation9 + $0x38] sm:$0xff] %v1946
    %1951 = vst [vmem:[#allocation9 + $0x70] sm:$0xff] %v1947
    %1952 = vst [vmem:[#allocation9 + $0x78] sm:$0xff] %v1948
    // Predicated region
    $region26: #{tpu_custom_call.1} parent=1 // pred_check
      _
    $region27: #{tpu_custom_call.1} parent=1 // pred_check_branch
      %1954 = sbr.rel (0) target = $region29
    $region28: #{tpu_custom_call.1} parent=1 // pred_region
      %s1956 = ssub.s32 2048, 2048
      %1957 = vsyncadd [#allocation4], %s1956
      %s1958 = sshll.u32 [#allocation9], 4
      %s1959 = int_to_ptr.vmem [resolvable:$true] %s1958
      %1964 = dma.vmem_to_hbm [thread:$0]  %s1959, 2048, %s3, [#allocation4], 1024, 1024, 64
    $region29: #{tpu_custom_call.1} parent=1 // pred_fallthru
      _
    // Predicated region
    $region30: #{tpu_custom_call.1} parent=1 // pred_check
      _
    $region31: #{tpu_custom_call.1} parent=1 // pred_check_branch
      %1966 = sbr.rel (0) target = $region33
    $region32: #{tpu_custom_call.1} parent=1 // pred_region
      %1967 = dma.done [#allocation4], 2048
    $region33: #{tpu_custom_call.1} parent=1 // pred_fallthru
      _
    %1968 = vsyncpa [#allocation3], 1
    %1969 = vsyncpa [#allocation4], 1
    %1970 = vsyncpa [#allocation5], 1
    %1971 = vsyncpa [#allocation7], 1

</llo_original>
